<compile_context>
chip_gen: v7x
topology: tpu7x:2x2x1
jax: 0.10.0
libtpu: 0.0.40
codegen_flags: <defaults>
</compile_context>

<pallas_src>
import jax
import jax.numpy as jnp
from jax import lax
from jax.experimental import pallas as pl
from jax.experimental.pallas import tpu as pltpu

# ----------------------- problem sizes (small, synthetic) --------------------
NGRAPHS = 4     # graphs per pallas_call (leading "parallel" grid axis)
N = 32          # nodes per graph
E = 64          # edges per graph
ADD_DIM = 16    # additional_input_dim == inputs.shape[-1]
D = 64          # input_dim (hidden width)
C = 8           # output_classes
ZPOS = 50
PE_LEN = 55     # real rows of the positional-encoding table (block padded to 64)
RANK = 4        # LoRA rank

# ----------------------------- slab layout ------------------------------------
# One f32 [SLAB_ROWS, 128] weight slab.  Row offsets of each block:
R_E1 = 0        # [64,128]  edge first layer [e_w1[:64] | e_w1[64:]]  (128-wide)
R_PE = 64       # [64, 64]  positional-encoding table (55 real rows)
R_AIL1 = 128    # [64, 64]  AdditionalInputLayer l1 (real [16,16])
R_AIL2 = 192    # [64, 64]  AdditionalInputLayer l2 (real [16,64])
R_C1 = 256      # [64, 64]  conv1
R_C2 = 320      # [64, 64]  conv2
R_C3 = 384      # [64, 64]  conv3
R_CB1 = 448     # [64, 64]  [cls_w1 | box_w1]
R_HEAD2 = 512   # [64, 64]  cls_w2 (rows 0..31 -> cols 8..15) + lora_a@lora_b (rows 32..63 -> cols 1..4)
R_E2 = 576      # [64, 64]  edge l2 (real [64,32])
R_E3 = 640      # [64, 64]  edge l3 (real [32,1] -> col 0)
R_BIAS = 704    # 10 bias rows, each stored [1,64] at lane offset 0
(B_AIL1, B_AIL2, B_C1, B_C2, B_C3, B_CB1, B_CLS2, B_E1, B_E2, B_E3) = range(10)
SLAB_ROWS = 720  # 704 + 10 bias rows, padded to a multiple of 8

# Column placement inside the 64-wide "tail" half of the node output rows.
BOX_COL0 = 1    # box at tail cols 1..4 (raw inputs[:,1:5] mask-added in place)
PRED_COL0 = 8   # predict at tail cols 8..15


# --------------------------------- kernel -------------------------------------
def gcn_kernel(inputs_ref, rc_ref, w_ref, out_ref):
    f32 = jnp.float32

    def mm(a, b):
        return jnp.dot(a, b, preferred_element_type=f32)

    def W(r0, cols=D):                      # [64, cols] weight block at lane offset 0
        return w_ref[r0:r0 + D, 0:cols]

    def bias(j):                            # [1, 64] bias row
        return w_ref[R_BIAS + j:R_BIAS + j + 1, 0:D]

    inp = inputs_ref[...]                                            # [N, 64] (cols 0..15 real)

    # pos = (inputs[:, 0] * zpos).long(); pos_embed = pe[pos]   (one-hot @ pe table)
    pos = (inp[:, 0:1] * ZPOS).astype(jnp.int32)
    pos = jnp.clip(pos, 0, PE_LEN - 1)   # torch would raise on OOB; clamp instead
    oh_pos = (pos == lax.broadcasted_iota(jnp.int32, (N, D), 1)).astype(f32)
    pos_embed = mm(oh_pos, W(R_PE))                                  # [N, 64]

    # AdditionalInputLayer: Linear -> ReLU -> Linear (zero-padded weights -> exact)
    h = jnp.maximum(mm(inp, W(R_AIL1)) + bias(B_AIL1), 0.0)
    feature = mm(h, W(R_AIL2)) + bias(B_AIL2)

    # conv1..3 (SimpleLinear ignores edge_index), ReLU after conv1 & conv2
    x = feature + pos_embed
    x = jnp.maximum(mm(x, W(R_C1)) + bias(B_C1), 0.0)
    x = jnp.maximum(mm(x, W(R_C2)) + bias(B_C2), 0.0)
    x = mm(x, W(R_C3)) + bias(B_C3)                                  # embeddings [N, 64]

    # cls + box heads: fused first layer, ONE merged second-layer matmul
    hcb = jnp.maximum(mm(x, W(R_CB1)) + bias(B_CB1), 0.0)            # [N, 64] = [hc | hb]
    t = mm(hcb, W(R_HEAD2))                                          # pred at cols 8..15, lora at cols 1..4
    lane = lax.broadcasted_iota(jnp.int32, (N, D), 1)
    box_mask = (lane >= BOX_COL0) & (lane < BOX_COL0 + 4)
    box_add = jnp.where(box_mask, inp, 0.0)                          # raw inputs[:,1:5] already at lanes 1..4
    tail = jnp.where(box_mask, jnp.tanh(t), t + bias(B_CLS2)) + box_add
    # node rows: [ embeddings | tail ]  -> full 128-lane store
    out_ref[0:N, :] = jnp.concatenate([x, tail], axis=-1)

    # edge head: y = x @ [W_EA | W_EB] (one 128-wide matmul), then ONE K=64
    # two-hot gather:  [oh_row | oh_col] ([E,2N]) @ [x@W_EA ; x@W_EB] ([2N,64]).
    y = mm(x, W(R_E1, cols=2 * D))                                   # [N, 128]
    stacked = jnp.concatenate([y[:, :D], y[:, D:]], axis=0)          # [2N, 64] (sublane concat)
    rc = rc_ref[...]                                                 # [E, 2] i32: [row, col + N]
    iota2n = lax.broadcasted_iota(jnp.int32, (E, 2 * N), 1)
    oh2 = ((rc[:, 0:1] == iota2n) | (rc[:, 1:2] == iota2n)).astype(f32)
    he = jnp.maximum(mm(oh2, stacked) + bias(B_E1), 0.0)             # [E, 64]
    he = jnp.maximum(mm(he, W(R_E2)) + bias(B_E2), 0.0)              # real cols 0..31
    # NOTE: cols 1..63 of `edge` carry sigmoid(0)=0.5 junk; wrapper only reads col 0.
    edge = jax.nn.sigmoid(mm(he, W(R_E3)) + bias(B_E3))              # real col 0
    out_ref[N:N + E, :] = jnp.concatenate([edge, jnp.zeros((E, D), f32)], axis=-1)


# ------------------------------ param packing ---------------------------------
def pack_params(pe, p):
    """Pack every weight/bias (zero-padded) into one [720, 128] f32 slab."""
    hi = lax.Precision.HIGHEST
    w_lora = jnp.dot(p["lora_a"], p["lora_b"], precision=hi)         # fold LoRA A @ B -> [32, 4]

    s = jnp.zeros((SLAB_ROWS, 2 * D), jnp.float32)
    s = s.at[R_E1:R_E1 + D, 0:D].set(p["e_w1"][:D])
    s = s.at[R_E1:R_E1 + D, D:2 * D].set(p["e_w1"][D:])
    s = s.at[R_PE:R_PE + PE_LEN, 0:D].set(pe)
    s = s.at[R_AIL1:R_AIL1 + ADD_DIM, 0:ADD_DIM].set(p["ail_w1"])
    s = s.at[R_AIL2:R_AIL2 + ADD_DIM, 0:D].set(p["ail_w2"])
    s = s.at[R_C1:R_C1 + D, 0:D].set(p["c1_w"])
    s = s.at[R_C2:R_C2 + D, 0:D].set(p["c2_w"])
    s = s.at[R_C3:R_C3 + D, 0:D].set(p["c3_w"])
    s = s.at[R_CB1:R_CB1 + D, 0:D].set(jnp.concatenate([p["cls_w1"], p["box_w1"]], axis=1))
    s = s.at[R_HEAD2:R_HEAD2 + D // 2, PRED_COL0:PRED_COL0 + C].set(p["cls_w2"])
    s = s.at[R_HEAD2 + D // 2:R_HEAD2 + D, BOX_COL0:BOX_COL0 + 4].set(w_lora)
    s = s.at[R_E2:R_E2 + D, 0:D // 2].set(p["e_w2"])
    s = s.at[R_E3:R_E3 + D // 2, 0:1].set(p["e_w3"])

    biases = [
        (B_AIL1, 0, p["ail_b1"]),
        (B_AIL2, 0, p["ail_b2"]),
        (B_C1, 0, p["c1_b"]),
        (B_C2, 0, p["c2_b"]),
        (B_C3, 0, p["c3_b"]),
        (B_CB1, 0, jnp.concatenate([p["cls_b1"], p["box_b1"]], axis=1)),
        (B_CLS2, PRED_COL0, p["cls_b2"]),
        (B_E1, 0, p["e_b1"]),
        (B_E2, 0, p["e_b2"]),
        (B_E3, 0, p["e_b3"]),
    ]
    for j, c0, b in biases:
        s = s.at[R_BIAS + j:R_BIAS + j + 1, c0:c0 + b.shape[1]].set(b)
    return s


# --------------------------------- wrapper ------------------------------------
def gcn_forward(inputs, edge_index, slab):
    """inputs [B, N, 16] f32, edge_index [B, 2, E] i32, slab [720, 128] f32."""
    nb = inputs.shape[0]
    # Batched input massaging (ONE fused XLA op each for the whole batch):
    # pad inputs to 64 lanes; pre-offset col indices by N for the two-hot gather.
    inputs64 = jnp.zeros((nb, N, D), jnp.float32).at[:, :, :ADD_DIM].set(inputs)
    rc2 = jnp.stack([edge_index[:, 0, :], edge_index[:, 1, :] + N], axis=-1).astype(jnp.int32)

    out = pl.pallas_call(
        gcn_kernel,
        out_shape=jax.ShapeDtypeStruct((nb, N + E, 2 * D), jnp.float32),
        grid=(nb,),
        in_specs=[
            pl.BlockSpec((None, N, D), lambda b: (b, 0, 0)),          # per-graph inputs
            pl.BlockSpec((None, E, 2), lambda b: (b, 0, 0)),          # per-graph edge indices
            pl.BlockSpec((SLAB_ROWS, 2 * D), lambda b: (0, 0)),       # weight slab: constant block -> VMEM-resident
        ],
        out_specs=pl.BlockSpec((None, N + E, 2 * D), lambda b: (b, 0, 0)),
        compiler_params=pltpu.CompilerParams(
            dimension_semantics=("parallel",)),                       # megacore / both v7x TCs
    )(inputs64, rc2, slab)

    return {
        "predict": out[:, :N, D + PRED_COL0: D + PRED_COL0 + C],
        "box": out[:, :N, D + BOX_COL0: D + BOX_COL0 + 4],
        "edge": out[:, N:, 0:1],
        "embeddings": out[:, :N, :D],
    }


# --------------------------- params / buffers ----------------------------------
def make_pe(channels):
    inv_freq = 1.0 / (55 * 10) ** (jnp.arange(0, channels, 2).astype(jnp.float32) / channels)
    t = jnp.arange(0, 55).astype(jnp.float32)[:, None]               # [55, 1]
    pos_enc_a = jnp.sin(t * inv_freq)
    pos_enc_b = jnp.cos(t * inv_freq)
    return jnp.concatenate([pos_enc_a, pos_enc_b], axis=1)           # [55, channels]


def init_params(key):
    def lin(k, i, o):
        k1, k2 = jax.random.split(k)
        s = 1.0 / float(i) ** 0.5
        w = jax.random.uniform(k1, (i, o), jnp.float32, -s, s)       # already [in, out]
        b = jax.random.uniform(k2, (1, o), jnp.float32, -s, s)
        return w, b

    ks = jax.random.split(key, 14)
    p = {}
    p["ail_w1"], p["ail_b1"] = lin(ks[0], ADD_DIM, ADD_DIM)
    p["ail_w2"], p["ail_b2"] = lin(ks[1], ADD_DIM, D)
    p["c1_w"], p["c1_b"] = lin(ks[2], D, D)
    p["c2_w"], p["c2_b"] = lin(ks[3], D, D)
    p["c3_w"], p["c3_b"] = lin(ks[4], D, D)
    p["cls_w1"], p["cls_b1"] = lin(ks[5], D, D // 2)
    p["cls_w2"], p["cls_b2"] = lin(ks[6], D // 2, C)
    p["box_w1"], p["box_b1"] = lin(ks[7], D, D // 2)
    p["lora_a"] = jax.random.normal(ks[8], (D // 2, RANK), jnp.float32) / jnp.sqrt(float(RANK))
    # NOTE: PyTorch inits LoRA B to zeros; use small nonzero values so the LoRA
    # path is numerically exercised (forward semantics unchanged).
    p["lora_b"] = jax.random.normal(ks[9], (RANK, 4), jnp.float32) * 0.1
    p["e_w1"], p["e_b1"] = lin(ks[10], 2 * D, D)
    p["e_w2"], p["e_b2"] = lin(ks[11], D, D // 2)
    p["e_w3"], p["e_b3"] = lin(ks[12], D // 2, 1)
    return p


# ------------------------------ JAX reference -----------------------------------
def reference(inputs, edge_index, pe, p):
    hi = lax.Precision.HIGHEST

    def mm(a, b):
        return jnp.dot(a, b, precision=hi)

    pos = (inputs[:, 0] * ZPOS).astype(jnp.int32)
    pos_embed = pe[pos]
    h = jnp.maximum(mm(inputs, p["ail_w1"]) + p["ail_b1"], 0.0)
    feature = mm(h, p["ail_w2"]) + p["ail_b2"]
    x = feature + pos_embed
    x = jnp.maximum(mm(x, p["c1_w"]) + p["c1_b"], 0.0)
    x = jnp.maximum(mm(x, p["c2_w"]) + p["c2_b"], 0.0)
    x = mm(x, p["c3_w"]) + p["c3_b"]
    hc = jnp.maximum(mm(x, p["cls_w1"]) + p["cls_b1"], 0.0)
    predict = mm(hc, p["cls_w2"]) + p["cls_b2"]
    hb = jnp.maximum(mm(x, p["box_w1"]) + p["box_b1"], 0.0)
    box = jnp.tanh(mm(mm(hb, p["lora_a"]), p["lora_b"])) + inputs[:, 1:5]
    row, col = edge_index
    ee = jnp.concatenate([x[row], x[col]], axis=1)
    he = jnp.maximum(mm(ee, p["e_w1"]) + p["e_b1"], 0.0)
    he = jnp.maximum(mm(he, p["e_w2"]) + p["e_b2"], 0.0)
    edge = jax.nn.sigmoid(mm(he, p["e_w3"]) + p["e_b3"])
    return {"predict": predict, "box": box, "edge": edge, "embeddings": x}


# ----------------------------------- main ---------------------------------------
if __name__ == "__main__":
    key = jax.random.PRNGKey(0)
    k_in, k_edge, k_par = jax.random.split(key, 3)

    # inputs[:, :, 0] in [0, 1) -> pos index in [0, 49] (< 55)
    inputs = jax.random.uniform(k_in, (NGRAPHS, N, ADD_DIM), jnp.float32)
    edge_index = jax.random.randint(k_edge, (NGRAPHS, 2, E), 0, N, jnp.int32)
    pe = make_pe(D)
    params = init_params(k_par)

    slab = pack_params(pe, params)       # one-time packing into a single weight slab

    fwd = jax.jit(gcn_forward)
    out = fwd(inputs, edge_index, slab)
    jax.block_until_ready(out)

    ref = jax.vmap(lambda i, e: reference(i, e, pe, params))(inputs, edge_index)
    for name in ("predict", "box", "edge", "embeddings"):
        assert out[name].shape == ref[name].shape, name
        assert jnp.allclose(out[name], ref[name], atol=1e-3, rtol=1e-3), name

    print("KERNEL_OK")
</pallas_src>

<mosaic_0001>
module attributes {stable_mosaic.version = 11 : i64} {
  func.func @gcn_kernel(%arg0: i32, %arg1: memref<1x32x64xf32, #tpu.memory_space<vmem>>, %arg2: memref<1x64x2xi32, #tpu.memory_space<vmem>>, %arg3: memref<720x128xf32, #tpu.memory_space<vmem>>, %arg4: memref<1x96x128xf32, #tpu.memory_space<vmem>>) attributes {dimension_semantics = [#tpu.dimension_semantics<parallel>], iteration_bounds = array<i64: 4>, scalar_prefetch = 0 : i64, scratch_operands = 0 : i64, tpu.core_type = #tpu.core_type<tc>, window_params = [{transform_indices = @transform_0, window_bounds = array<i64: 1, 32, 64>}, {transform_indices = @transform_1, window_bounds = array<i64: 1, 64, 2>}, {pipeline_mode = #tpu.pipeline_mode<synchronous>, transform_indices = @transform_2, window_bounds = array<i64: 720, 128>}, {transform_indices = @transform_3, window_bounds = array<i64: 1, 96, 128>}]} {
    %c0 = arith.constant 0 : index
    %c0_0 = arith.constant 0 : index
    %c0_1 = arith.constant 0 : index
    %0 = vector.load %arg1[%c0, %c0_0, %c0_1] : memref<1x32x64xf32, #tpu.memory_space<vmem>>, vector<1x32x64xf32>
    %1 = vector.shape_cast %0 : vector<1x32x64xf32> to vector<32x64xf32>
    %2 = vector.extract_strided_slice %1 {offsets = [0, 0], sizes = [32, 1], strides = [1, 1]} : vector<32x64xf32> to vector<32x1xf32>
    %cst = arith.constant 5.000000e+01 : f32
    %3 = vector.broadcast %cst : f32 to vector<32x1xf32>
    %4 = arith.mulf %2, %3 : vector<32x1xf32>
    %5 = arith.fptosi %4 : vector<32x1xf32> to vector<32x1xi32>
    %c0_i32 = arith.constant 0 : i32
    %c54_i32 = arith.constant 54 : i32
    %6 = vector.broadcast %c0_i32 : i32 to vector<32x1xi32>
    %7 = arith.maxsi %6, %5 : vector<32x1xi32>
    %8 = vector.broadcast %c54_i32 : i32 to vector<32x1xi32>
    %9 = arith.minsi %8, %7 : vector<32x1xi32>
    %10 = tpu.iota {dimensions = array<i32: 1>} : vector<32x64xi32>
    %11 = vector.broadcast %9 : vector<32x1xi32> to vector<32x64xi32>
    %12 = arith.cmpi eq, %11, %10 : vector<32x64xi32>
    %13 = arith.extui %12 : vector<32x64xi1> to vector<32x64xi32>
    %14 = arith.sitofp %13 : vector<32x64xi32> to vector<32x64xf32>
    %c64 = arith.constant 64 : index
    %c0_2 = arith.constant 0 : index
    %15 = vector.load %arg3[%c64, %c0_2] : memref<720x128xf32, #tpu.memory_space<vmem>>, vector<64x64xf32>
    %cst_3 = arith.constant dense<0.000000e+00> : vector<32x64xf32>
    %16 = tpu.matmul %14, %15, %cst_3 {dimension_numbers = #tpu.dot_dimension_numbers<[1], [0], [0], [1], [0, 0, 1, 1], [], []>} : vector<32x64xf32>, vector<64x64xf32>, vector<32x64xf32> -> vector<32x64xf32>
    %c128 = arith.constant 128 : index
    %c0_4 = arith.constant 0 : index
    %17 = vector.load %arg3[%c128, %c0_4] : memref<720x128xf32, #tpu.memory_space<vmem>>, vector<64x64xf32>
    %cst_5 = arith.constant dense<0.000000e+00> : vector<32x64xf32>
    %18 = tpu.matmul %1, %17, %cst_5 {dimension_numbers = #tpu.dot_dimension_numbers<[1], [0], [0], [1], [0, 0, 1, 1], [], []>} : vector<32x64xf32>, vector<64x64xf32>, vector<32x64xf32> -> vector<32x64xf32>
    %c704 = arith.constant 704 : index
    %c0_6 = arith.constant 0 : index
    %19 = vector.load %arg3[%c704, %c0_6] : memref<720x128xf32, #tpu.memory_space<vmem>>, vector<1x64xf32>
    %20 = vector.broadcast %19 : vector<1x64xf32> to vector<32x64xf32>
    %21 = arith.addf %18, %20 : vector<32x64xf32>
    %cst_7 = arith.constant 0.000000e+00 : f32
    %22 = vector.broadcast %cst_7 : f32 to vector<32x64xf32>
    %23 = arith.maximumf %21, %22 : vector<32x64xf32>
    %c192 = arith.constant 192 : index
    %c0_8 = arith.constant 0 : index
    %24 = vector.load %arg3[%c192, %c0_8] : memref<720x128xf32, #tpu.memory_space<vmem>>, vector<64x64xf32>
    %cst_9 = arith.constant dense<0.000000e+00> : vector<32x64xf32>
    %25 = tpu.matmul %23, %24, %cst_9 {dimension_numbers = #tpu.dot_dimension_numbers<[1], [0], [0], [1], [0, 0, 1, 1], [], []>} : vector<32x64xf32>, vector<64x64xf32>, vector<32x64xf32> -> vector<32x64xf32>
    %c705 = arith.constant 705 : index
    %c0_10 = arith.constant 0 : index
    %26 = vector.load %arg3[%c705, %c0_10] : memref<720x128xf32, #tpu.memory_space<vmem>>, vector<1x64xf32>
    %27 = vector.broadcast %26 : vector<1x64xf32> to vector<32x64xf32>
    %28 = arith.addf %25, %27 : vector<32x64xf32>
    %29 = arith.addf %28, %16 : vector<32x64xf32>
    %c256 = arith.constant 256 : index
    %c0_11 = arith.constant 0 : index
    %30 = vector.load %arg3[%c256, %c0_11] : memref<720x128xf32, #tpu.memory_space<vmem>>, vector<64x64xf32>
    %cst_12 = arith.constant dense<0.000000e+00> : vector<32x64xf32>
    %31 = tpu.matmul %29, %30, %cst_12 {dimension_numbers = #tpu.dot_dimension_numbers<[1], [0], [0], [1], [0, 0, 1, 1], [], []>} : vector<32x64xf32>, vector<64x64xf32>, vector<32x64xf32> -> vector<32x64xf32>
    %c706 = arith.constant 706 : index
    %c0_13 = arith.constant 0 : index
    %32 = vector.load %arg3[%c706, %c0_13] : memref<720x128xf32, #tpu.memory_space<vmem>>, vector<1x64xf32>
    %33 = vector.broadcast %32 : vector<1x64xf32> to vector<32x64xf32>
    %34 = arith.addf %31, %33 : vector<32x64xf32>
    %cst_14 = arith.constant 0.000000e+00 : f32
    %35 = vector.broadcast %cst_14 : f32 to vector<32x64xf32>
    %36 = arith.maximumf %34, %35 : vector<32x64xf32>
    %c320 = arith.constant 320 : index
    %c0_15 = arith.constant 0 : index
    %37 = vector.load %arg3[%c320, %c0_15] : memref<720x128xf32, #tpu.memory_space<vmem>>, vector<64x64xf32>
    %cst_16 = arith.constant dense<0.000000e+00> : vector<32x64xf32>
    %38 = tpu.matmul %36, %37, %cst_16 {dimension_numbers = #tpu.dot_dimension_numbers<[1], [0], [0], [1], [0, 0, 1, 1], [], []>} : vector<32x64xf32>, vector<64x64xf32>, vector<32x64xf32> -> vector<32x64xf32>
    %c707 = arith.constant 707 : index
    %c0_17 = arith.constant 0 : index
    %39 = vector.load %arg3[%c707, %c0_17] : memref<720x128xf32, #tpu.memory_space<vmem>>, vector<1x64xf32>
    %40 = vector.broadcast %39 : vector<1x64xf32> to vector<32x64xf32>
    %41 = arith.addf %38, %40 : vector<32x64xf32>
    %cst_18 = arith.constant 0.000000e+00 : f32
    %42 = vector.broadcast %cst_18 : f32 to vector<32x64xf32>
    %43 = arith.maximumf %41, %42 : vector<32x64xf32>
    %c384 = arith.constant 384 : index
    %c0_19 = arith.constant 0 : index
    %44 = vector.load %arg3[%c384, %c0_19] : memref<720x128xf32, #tpu.memory_space<vmem>>, vector<64x64xf32>
    %cst_20 = arith.constant dense<0.000000e+00> : vector<32x64xf32>
    %45 = tpu.matmul %43, %44, %cst_20 {dimension_numbers = #tpu.dot_dimension_numbers<[1], [0], [0], [1], [0, 0, 1, 1], [], []>} : vector<32x64xf32>, vector<64x64xf32>, vector<32x64xf32> -> vector<32x64xf32>
    %c708 = arith.constant 708 : index
    %c0_21 = arith.constant 0 : index
    %46 = vector.load %arg3[%c708, %c0_21] : memref<720x128xf32, #tpu.memory_space<vmem>>, vector<1x64xf32>
    %47 = vector.broadcast %46 : vector<1x64xf32> to vector<32x64xf32>
    %48 = arith.addf %45, %47 : vector<32x64xf32>
    %c448 = arith.constant 448 : index
    %c0_22 = arith.constant 0 : index
    %49 = vector.load %arg3[%c448, %c0_22] : memref<720x128xf32, #tpu.memory_space<vmem>>, vector<64x64xf32>
    %cst_23 = arith.constant dense<0.000000e+00> : vector<32x64xf32>
    %50 = tpu.matmul %48, %49, %cst_23 {dimension_numbers = #tpu.dot_dimension_numbers<[1], [0], [0], [1], [0, 0, 1, 1], [], []>} : vector<32x64xf32>, vector<64x64xf32>, vector<32x64xf32> -> vector<32x64xf32>
    %c709 = arith.constant 709 : index
    %c0_24 = arith.constant 0 : index
    %51 = vector.load %arg3[%c709, %c0_24] : memref<720x128xf32, #tpu.memory_space<vmem>>, vector<1x64xf32>
    %52 = vector.broadcast %51 : vector<1x64xf32> to vector<32x64xf32>
    %53 = arith.addf %50, %52 : vector<32x64xf32>
    %cst_25 = arith.constant 0.000000e+00 : f32
    %54 = vector.broadcast %cst_25 : f32 to vector<32x64xf32>
    %55 = arith.maximumf %53, %54 : vector<32x64xf32>
    %c512 = arith.constant 512 : index
    %c0_26 = arith.constant 0 : index
    %56 = vector.load %arg3[%c512, %c0_26] : memref<720x128xf32, #tpu.memory_space<vmem>>, vector<64x64xf32>
    %cst_27 = arith.constant dense<0.000000e+00> : vector<32x64xf32>
    %57 = tpu.matmul %55, %56, %cst_27 {dimension_numbers = #tpu.dot_dimension_numbers<[1], [0], [0], [1], [0, 0, 1, 1], [], []>} : vector<32x64xf32>, vector<64x64xf32>, vector<32x64xf32> -> vector<32x64xf32>
    %58 = tpu.iota {dimensions = array<i32: 1>} : vector<32x64xi32>
    %c1_i32 = arith.constant 1 : i32
    %59 = vector.broadcast %c1_i32 : i32 to vector<32x64xi32>
    %60 = arith.cmpi sge, %58, %59 : vector<32x64xi32>
    %c5_i32 = arith.constant 5 : i32
    %61 = vector.broadcast %c5_i32 : i32 to vector<32x64xi32>
    %62 = arith.cmpi slt, %58, %61 : vector<32x64xi32>
    %63 = arith.andi %60, %62 : vector<32x64xi1>
    %cst_28 = arith.constant 0.000000e+00 : f32
    %64 = vector.broadcast %cst_28 : f32 to vector<32x64xf32>
    %65 = arith.select %63, %1, %64 : vector<32x64xi1>, vector<32x64xf32>
    %66 = math.tanh %57 : vector<32x64xf32>
    %c710 = arith.constant 710 : index
    %c0_29 = arith.constant 0 : index
    %67 = vector.load %arg3[%c710, %c0_29] : memref<720x128xf32, #tpu.memory_space<vmem>>, vector<1x64xf32>
    %68 = vector.broadcast %67 : vector<1x64xf32> to vector<32x64xf32>
    %69 = arith.addf %57, %68 : vector<32x64xf32>
    %70 = arith.select %63, %66, %69 : vector<32x64xi1>, vector<32x64xf32>
    %71 = arith.addf %70, %65 : vector<32x64xf32>
    %72 = tpu.concatenate %48, %71 in 1 : vector<32x64xf32>, vector<32x64xf32> -> vector<32x128xf32>
    %c0_30 = arith.constant 0 : index
    %c0_31 = arith.constant 0 : index
    %c0_32 = arith.constant 0 : index
    %73 = vector.load %arg4[%c0_30, %c0_31, %c0_32] : memref<1x96x128xf32, #tpu.memory_space<vmem>>, vector<1x32x128xf32>
    %74 = vector.shape_cast %73 : vector<1x32x128xf32> to vector<32x128xf32>
    %75 = vector.shape_cast %72 : vector<32x128xf32> to vector<1x32x128xf32>
    tpu.vector_store %arg4[%c0_30, %c0_31, %c0_32], %75 {strides = array<i32>} : memref<1x96x128xf32, #tpu.memory_space<vmem>>, vector<1x32x128xf32>,
    %c0_33 = arith.constant 0 : index
    %c0_34 = arith.constant 0 : index
    %76 = vector.load %arg3[%c0_33, %c0_34] : memref<720x128xf32, #tpu.memory_space<vmem>>, vector<64x128xf32>
    %cst_35 = arith.constant dense<0.000000e+00> : vector<32x128xf32>
    %77 = tpu.matmul %48, %76, %cst_35 {dimension_numbers = #tpu.dot_dimension_numbers<[1], [0], [0], [1], [0, 0, 1, 1], [], []>} : vector<32x64xf32>, vector<64x128xf32>, vector<32x128xf32> -> vector<32x128xf32>
    %78 = vector.extract_strided_slice %77 {offsets = [0, 0], sizes = [32, 64], strides = [1, 1]} : vector<32x128xf32> to vector<32x64xf32>
    %79 = vector.extract_strided_slice %77 {offsets = [0, 64], sizes = [32, 64], strides = [1, 1]} : vector<32x128xf32> to vector<32x64xf32>
    %80 = tpu.concatenate %78, %79 in 0 : vector<32x64xf32>, vector<32x64xf32> -> vector<64x64xf32>
    %c0_36 = arith.constant 0 : index
    %c0_37 = arith.constant 0 : index
    %c0_38 = arith.constant 0 : index
    %81 = vector.load %arg2[%c0_36, %c0_37, %c0_38] : memref<1x64x2xi32, #tpu.memory_space<vmem>>, vector<1x64x2xi32>
    %82 = vector.shape_cast %81 : vector<1x64x2xi32> to vector<64x2xi32>
    %83 = tpu.iota {dimensions = array<i32: 1>} : vector<64x64xi32>
    %84 = vector.extract_strided_slice %82 {offsets = [0, 0], sizes = [64, 1], strides = [1, 1]} : vector<64x2xi32> to vector<64x1xi32>
    %85 = vector.broadcast %84 : vector<64x1xi32> to vector<64x64xi32>
    %86 = arith.cmpi eq, %85, %83 : vector<64x64xi32>
    %87 = vector.extract_strided_slice %82 {offsets = [0, 1], sizes = [64, 1], strides = [1, 1]} : vector<64x2xi32> to vector<64x1xi32>
    %88 = vector.broadcast %87 : vector<64x1xi32> to vector<64x64xi32>
    %89 = arith.cmpi eq, %88, %83 : vector<64x64xi32>
    %90 = arith.ori %86, %89 : vector<64x64xi1>
    %91 = arith.extui %90 : vector<64x64xi1> to vector<64x64xi32>
    %92 = arith.sitofp %91 : vector<64x64xi32> to vector<64x64xf32>
    %cst_39 = arith.constant dense<0.000000e+00> : vector<64x64xf32>
    %93 = tpu.matmul %92, %80, %cst_39 {dimension_numbers = #tpu.dot_dimension_numbers<[1], [0], [0], [1], [0, 0, 1, 1], [], []>} : vector<64x64xf32>, vector<64x64xf32>, vector<64x64xf32> -> vector<64x64xf32>
    %c711 = arith.constant 711 : index
    %c0_40 = arith.constant 0 : index
    %94 = vector.load %arg3[%c711, %c0_40] : memref<720x128xf32, #tpu.memory_space<vmem>>, vector<1x64xf32>
    %95 = vector.broadcast %94 : vector<1x64xf32> to vector<64x64xf32>
    %96 = arith.addf %93, %95 : vector<64x64xf32>
    %cst_41 = arith.constant 0.000000e+00 : f32
    %97 = vector.broadcast %cst_41 : f32 to vector<64x64xf32>
    %98 = arith.maximumf %96, %97 : vector<64x64xf32>
    %c576 = arith.constant 576 : index
    %c0_42 = arith.constant 0 : index
    %99 = vector.load %arg3[%c576, %c0_42] : memref<720x128xf32, #tpu.memory_space<vmem>>, vector<64x64xf32>
    %cst_43 = arith.constant dense<0.000000e+00> : vector<64x64xf32>
    %100 = tpu.matmul %98, %99, %cst_43 {dimension_numbers = #tpu.dot_dimension_numbers<[1], [0], [0], [1], [0, 0, 1, 1], [], []>} : vector<64x64xf32>, vector<64x64xf32>, vector<64x64xf32> -> vector<64x64xf32>
    %c712 = arith.constant 712 : index
    %c0_44 = arith.constant 0 : index
    %101 = vector.load %arg3[%c712, %c0_44] : memref<720x128xf32, #tpu.memory_space<vmem>>, vector<1x64xf32>
    %102 = vector.broadcast %101 : vector<1x64xf32> to vector<64x64xf32>
    %103 = arith.addf %100, %102 : vector<64x64xf32>
    %cst_45 = arith.constant 0.000000e+00 : f32
    %104 = vector.broadcast %cst_45 : f32 to vector<64x64xf32>
    %105 = arith.maximumf %103, %104 : vector<64x64xf32>
    %c640 = arith.constant 640 : index
    %c0_46 = arith.constant 0 : index
    %106 = vector.load %arg3[%c640, %c0_46] : memref<720x128xf32, #tpu.memory_space<vmem>>, vector<64x64xf32>
    %cst_47 = arith.constant dense<0.000000e+00> : vector<64x64xf32>
    %107 = tpu.matmul %105, %106, %cst_47 {dimension_numbers = #tpu.dot_dimension_numbers<[1], [0], [0], [1], [0, 0, 1, 1], [], []>} : vector<64x64xf32>, vector<64x64xf32>, vector<64x64xf32> -> vector<64x64xf32>
    %c713 = arith.constant 713 : index
    %c0_48 = arith.constant 0 : index
    %108 = vector.load %arg3[%c713, %c0_48] : memref<720x128xf32, #tpu.memory_space<vmem>>, vector<1x64xf32>
    %109 = vector.broadcast %108 : vector<1x64xf32> to vector<64x64xf32>
    %110 = arith.addf %107, %109 : vector<64x64xf32>
    %111 = arith.negf %110 : vector<64x64xf32>
    %112 = math.exp %111 : vector<64x64xf32>
    %cst_49 = arith.constant 1.000000e+00 : f32
    %113 = vector.broadcast %cst_49 : f32 to vector<64x64xf32>
    %114 = arith.addf %113, %112 : vector<64x64xf32>
    %115 = arith.divf %113, %114 : vector<64x64xf32>
    %cst_50 = arith.constant 0.000000e+00 : f32
    %116 = vector.broadcast %cst_50 : f32 to vector<64x64xf32>
    %117 = tpu.concatenate %115, %116 in 1 : vector<64x64xf32>, vector<64x64xf32> -> vector<64x128xf32>
    %c0_51 = arith.constant 0 : index
    %c32 = arith.constant 32 : index
    %c0_52 = arith.constant 0 : index
    %118 = vector.load %arg4[%c0_51, %c32, %c0_52] : memref<1x96x128xf32, #tpu.memory_space<vmem>>, vector<1x64x128xf32>
    %119 = vector.shape_cast %118 : vector<1x64x128xf32> to vector<64x128xf32>
    %120 = vector.shape_cast %117 : vector<64x128xf32> to vector<1x64x128xf32>
    tpu.vector_store %arg4[%c0_51, %c32, %c0_52], %120 {strides = array<i32>} : memref<1x96x128xf32, #tpu.memory_space<vmem>>, vector<1x64x128xf32>,
    return
  }
  func.func @transform_0(%arg0: i32) -> (i32, i32, i32) {
    %c0_i32 = arith.constant 0 : i32
    %c0_i32_0 = arith.constant 0 : i32
    %c0_i32_1 = arith.constant 0 : i32
    return %arg0, %c0_i32, %c0_i32_0 : i32, i32, i32
  }
  func.func @transform_1(%arg0: i32) -> (i32, i32, i32) {
    %c0_i32 = arith.constant 0 : i32
    %c0_i32_0 = arith.constant 0 : i32
    %c0_i32_1 = arith.constant 0 : i32
    return %arg0, %c0_i32, %c0_i32_0 : i32, i32, i32
  }
  func.func @transform_2(%arg0: i32) -> (i32, i32) {
    %c0_i32 = arith.constant 0 : i32
    %c0_i32_0 = arith.constant 0 : i32
    %c0_i32_1 = arith.constant 0 : i32
    return %c0_i32, %c0_i32_0 : i32, i32
  }
  func.func @transform_3(%arg0: i32) -> (i32, i32, i32) {
    %c0_i32 = arith.constant 0 : i32
    %c0_i32_0 = arith.constant 0 : i32
    %c0_i32_1 = arith.constant 0 : i32
    return %arg0, %c0_i32, %c0_i32_0 : i32, i32, i32
  }
}

</mosaic_0001>

<llo_original>
// kernel: gcn_forward.1
$region0: #{gcn_forward.1}
  #allocation0 [shape = 'u32[]', space=smem, size = 0x4, offset = 0x4, fixed_abs, tag = 'smem constant byte address 0x4 - core index']
  #allocation1 [shape = 'u32[144,128]{1,0:T(1,128)}', space=vmem, size = 0x12000, scoped, tag = 'internal scratch']
  %s0 = inlined_call_operand.vmem [shape: f32[4,32,64], index: 0, kind: input, shape index: {}]
  %s1 = inlined_call_operand.vmem [shape: s32[4,64,2], index: 1, kind: input, shape index: {}]
  %s2 = inlined_call_operand.vmem [shape: f32[720,128], index: 2, kind: input, shape index: {}]
  %s3 = inlined_call_operand.vmem [shape: f32[4,96,128], index: 3, kind: output, shape index: {}]
  %s4 = sld [smem:[#allocation0]]
  $region45: #{gcn_forward.1} parent=0
    _
  %s6 = ssub.s32 1, %s4
  %s7 = scalar_select 0, %s6, %s4
  loop: start=0, step=1, limit=6
  $region2: #{gcn_forward.1} parent=0 // loop_pre_header
    _
  $region3: #{gcn_forward.1} parent=0 // loop_header
    %s9 = sphi 0, %s13
    %p10 = scmp.ge.s32.totalorder %s9, 6
    %s19 = sphi 0, %s21
    %s22 = sphi 0, %s19
    %s23 = sphi 0, %s22
    %s39 = sphi 0, %s23
    %s45 = sphi 0, %s47
    %s48 = sphi 0, %s45
    %s49 = sphi 0, %s48
    %s65 = sphi 0, %s49
    %s69 = sphi 0, %s69
    %s71 = sphi 0, %s69
    %s72 = sphi 0, %s71
    %s86 = sphi 0, %s72
    %s92 = sphi 0, %s94
    %s95 = sphi 0, %s92
    %s96 = sphi 0, %s95
    %s112 = sphi 0, %s96
  $region4: #{gcn_forward.1} parent=0 // loop_header_branch
    %12 = sbr.rel (%p10) target = $region8
  $region5: #{gcn_forward.1} parent=0 // loop_body
    %s14 = ssub.s32 %s9, 1
    %s15 = ssub.s32 %s9, 2
    %s16 = sadd.s32 %s9, 1
    %s17 = ssub.s32 %s9, %s16
    %p18 = scmp.eq.s32.totalorder %s17, 0
    %s20 = sadd.s32 %s19, 1
    %s21 = scalar_select %p18, %s19, %s20
    %p24 = pneg %p18
    %p25 = scmp.eq.s32.totalorder %s9, 3
    %p26 = por %p24, %p25
    %p27 = scmp.ne.s32.totalorder %s19, %s22
    %p28 = scmp.eq.s32.totalorder %s9, 0
    %p29 = por %p27, %p28
    %p30 = scmp.ne.s32.totalorder %s19, %s22
    %p31 = scmp.eq.s32.totalorder %s14, 3
    %p32 = por %p30, %p31
    %p33 = scmp.ne.s32.totalorder %s22, %s23
    %p34 = scmp.eq.s32.totalorder %s14, 0
    %p35 = por %p33, %p34
    %p36 = scmp.ne.s32.totalorder %s22, %s23
    %p37 = scmp.eq.s32.totalorder %s15, 3
    %p38 = por %p36, %p37
    %p40 = scmp.ne.s32.totalorder %s23, %s39
    %p41 = scmp.eq.s32.totalorder %s15, 0
    %p42 = por %p40, %p41
    %s43 = ssub.s32 %s9, %s16
    %p44 = scmp.eq.s32.totalorder %s43, 0
    %s46 = sadd.s32 %s45, 1
    %s47 = scalar_select %p44, %s45, %s46
    %p50 = pneg %p44
    %p51 = scmp.eq.s32.totalorder %s9, 3
    %p52 = por %p50, %p51
    %p53 = scmp.ne.s32.totalorder %s45, %s48
    %p54 = scmp.eq.s32.totalorder %s9, 0
    %p55 = por %p53, %p54
    %p56 = scmp.ne.s32.totalorder %s45, %s48
    %p57 = scmp.eq.s32.totalorder %s14, 3
    %p58 = por %p56, %p57
    %p59 = scmp.ne.s32.totalorder %s48, %s49
    %p60 = scmp.eq.s32.totalorder %s14, 0
    %p61 = por %p59, %p60
    %p62 = scmp.ne.s32.totalorder %s48, %s49
    %p63 = scmp.eq.s32.totalorder %s15, 3
    %p64 = por %p62, %p63
    %p66 = scmp.ne.s32.totalorder %s49, %s65
    %p67 = scmp.eq.s32.totalorder %s15, 0
    %p68 = por %p66, %p67
    %s70 = sadd.s32 %s69, 1
    %p73 = scmp.eq.s32.totalorder %s9, 3
    %p74 = scmp.ne.s32.totalorder %s69, %s71
    %p75 = scmp.eq.s32.totalorder %s9, 0
    %p76 = por %p74, %p75
    %p77 = scmp.ne.s32.totalorder %s69, %s71
    %p78 = scmp.eq.s32.totalorder %s14, 3
    %p79 = por %p77, %p78
    %p80 = scmp.ne.s32.totalorder %s71, %s72
    %p81 = scmp.eq.s32.totalorder %s14, 0
    %p82 = por %p80, %p81
    %p83 = scmp.ne.s32.totalorder %s71, %s72
    %p84 = scmp.eq.s32.totalorder %s15, 3
    %p85 = por %p83, %p84
    %p87 = scmp.ne.s32.totalorder %s72, %s86
    %p88 = scmp.eq.s32.totalorder %s15, 0
    %p89 = por %p87, %p88
    %s90 = ssub.s32 %s9, %s16
    %p91 = scmp.eq.s32.totalorder %s90, 0
    %s93 = sadd.s32 %s92, 1
    %s94 = scalar_select %p91, %s92, %s93
    %p97 = pneg %p91
    %p98 = scmp.eq.s32.totalorder %s9, 3
    %p99 = por %p97, %p98
    %p100 = scmp.ne.s32.totalorder %s92, %s95
    %p101 = scmp.eq.s32.totalorder %s9, 0
    %p102 = por %p100, %p101
    %p103 = scmp.ne.s32.totalorder %s92, %s95
    %p104 = scmp.eq.s32.totalorder %s14, 3
    %p105 = por %p103, %p104
    %p106 = scmp.ne.s32.totalorder %s95, %s96
    %p107 = scmp.eq.s32.totalorder %s14, 0
    %p108 = por %p106, %p107
    %p109 = scmp.ne.s32.totalorder %s95, %s96
    %p110 = scmp.eq.s32.totalorder %s15, 3
    %p111 = por %p109, %p110
    %p113 = scmp.ne.s32.totalorder %s96, %s112
    %p114 = scmp.eq.s32.totalorder %s15, 0
    %p115 = por %p113, %p114
    %p116 = scmp.le.s32.totalorder 1, %s9
    %p117 = scmp.lt.s32.totalorder %s9, 5
    %p118 = pnand %p116, %p117
    %p119 = pneg %p118
    // Predicated region
    $region9: #{gcn_forward.1} parent=5 // pred_check
      _
    $region10: #{gcn_forward.1} parent=5 // pred_check_branch
      %121 = sbr.rel (%p118) target = $region12
    $region11: #{gcn_forward.1} parent=5 // pred_region
      %s122 = ssub.s32 %s9, 1
      // Predicated region
      $region13: #{gcn_forward.1} parent=11 // pred_check
        %p123 = pneg %p82
      $region14: #{gcn_forward.1} parent=11 // pred_check_branch
        %125 = sbr.rel (%p123) target = $region16
      $region15: #{gcn_forward.1} parent=11 // pred_region
        _
      $region16: #{gcn_forward.1} parent=11 // pred_fallthru
        _
    $region12: #{gcn_forward.1} parent=5 // pred_fallthru
      _
    %p126 = scmp.lt.s32.totalorder %s9, 4
    // Predicated region
    $region17: #{gcn_forward.1} parent=5 // pred_check
      %p127 = pneg %p126
    $region18: #{gcn_forward.1} parent=5 // pred_check_branch
      %129 = sbr.rel (%p127) target = $region20
    $region19: #{gcn_forward.1} parent=5 // pred_region
      // Predicated region
      $region21: #{gcn_forward.1} parent=19 // pred_check
        %p130 = pneg %p29
      $region22: #{gcn_forward.1} parent=19 // pred_check_branch
        %132 = sbr.rel (%p130) target = $region24
      $region23: #{gcn_forward.1} parent=19 // pred_region
        %p133 = scmp.lt.s32.totalorder %s9, 3
        %s134 = scalar_select %p133, %s9, 3
        %s135 = smul.addr %s134, 4
        %s136 = smul.addr %s135, 8
        %s137 = scalar_lea.vmem %s0, %s136
      $region24: #{gcn_forward.1} parent=19 // pred_fallthru
        _
      // Predicated region
      $region25: #{gcn_forward.1} parent=19 // pred_check
        %p138 = pneg %p55
      $region26: #{gcn_forward.1} parent=19 // pred_check_branch
        %140 = sbr.rel (%p138) target = $region28
      $region27: #{gcn_forward.1} parent=19 // pred_region
        %p141 = scmp.lt.s32.totalorder %s9, 3
        %s142 = scalar_select %p141, %s9, 3
        %s143 = smul.addr %s142, 8
        %s144 = smul.addr %s143, 8
        %s145 = scalar_lea.vmem %s1, %s144
      $region28: #{gcn_forward.1} parent=19 // pred_fallthru
        _
    $region20: #{gcn_forward.1} parent=5 // pred_fallthru
      _
    %p146 = scmp.le.s32.totalorder 1, %s9
    %p147 = scmp.lt.s32.totalorder %s9, 5
    %p148 = pnand %p146, %p147
    %p149 = pneg %p148
    // Predicated region
    $region29: #{gcn_forward.1} parent=5 // pred_check
      _
    $region30: #{gcn_forward.1} parent=5 // pred_check_branch
      %151 = sbr.rel (%p148) target = $region32
    $region31: #{gcn_forward.1} parent=5 // pred_region
      %s152 = ssub.s32 %s9, 1
      %p153 = scmp.lt.s32.totalorder %s14, 3
      %s154 = scalar_select %p153, %s14, 3
      %s155 = smul.addr %s154, 4
      %s156 = smul.addr %s155, 8
      %s157 = scalar_lea.vmem %s0, %s156
      %p158 = pneg %p35
      %p159 = pneg %p32
      %p160 = scmp.lt.s32.totalorder %s14, 3
      %s161 = scalar_select %p160, %s14, 3
      %s162 = smul.addr %s161, 8
      %s163 = smul.addr %s162, 8
      %s164 = scalar_lea.vmem %s1, %s163
      %p165 = pneg %p61
      %p166 = pneg %p58
      %p167 = pneg %p82
      %p168 = pneg %p79
      %p169 = pneg %p108
      %p170 = pneg %p105
      %p171 = scmp.lt.s32.totalorder %s14, 3
      %s172 = scalar_select %p171, %s14, 3
      %s173 = smul.addr %s172, 12
      %s174 = smul.addr %s173, 8
      %s175 = scalar_lea.vmem %s3, %s174
      %p176 = scmp.lt.s32.totalorder %s14, 3
      %s177 = scalar_select %p176, %s14, 3
      %s178 = smul.addr %s177, 4
      %s179 = smul.addr %s178, 8
      %s180 = scalar_lea.vmem %s0, %s179
      %p181 = scmp.lt.s32.totalorder %s14, 3
      %s182 = scalar_select %p181, %s14, 3
      %s183 = smul.addr %s182, 8
      %s184 = smul.addr %s183, 8
      %s185 = scalar_lea.vmem %s1, %s184
      %p186 = scmp.lt.s32.totalorder %s14, 3
      %s187 = scalar_select %p186, %s14, 3
      %s188 = smul.addr %s187, 12
      %s189 = smul.addr %s188, 8
      %s190 = scalar_lea.vmem %s3, %s189
      %v191 = vld [vmem:[%s180] sm:$0xff]
      %v192 = vld [vmem:[%s180 + $0x8] sm:$0xff]
      %v193 = vld [vmem:[%s180 + $0x10] sm:$0xff]
      %v194 = vld [vmem:[%s180 + $0x18] sm:$0xff]
      %v195 = vmul.f32 %v191, 50.0
      %v196 = vmul.f32 %v192, 50.0
      %v197 = vmul.f32 %v193, 50.0
      %v198 = vmul.f32 %v194, 50.0
      %v199 = vcvt.f32.s32.to.zero.pseudo %v195
      %v200 = vcvt.f32.s32.to.zero.pseudo %v196
      %v201 = vcvt.f32.s32.to.zero.pseudo %v197
      %v202 = vcvt.f32.s32.to.zero.pseudo %v198
      %vm203 = vcmp.gt.s32.totalorder %v199, 0
      %v204 = vsel %vm203, %v199, 0
      %vm205 = vcmp.gt.s32.totalorder %v200, 0
      %v206 = vsel %vm205, %v200, 0
      %vm207 = vcmp.gt.s32.totalorder %v201, 0
      %v208 = vsel %vm207, %v201, 0
      %vm209 = vcmp.gt.s32.totalorder %v202, 0
      %v210 = vsel %vm209, %v202, 0
      %vm211 = vcmp.lt.s32.totalorder %v204, 54
      %v212 = vsel %vm211, %v204, 54
      %vm213 = vcmp.lt.s32.totalorder %v206, 54
      %v214 = vsel %vm213, %v206, 54
      %vm215 = vcmp.lt.s32.totalorder %v208, 54
      %v216 = vsel %vm215, %v208, 54
      %vm217 = vcmp.lt.s32.totalorder %v210, 54
      %v218 = vsel %vm217, %v210, 54
      %v219 = vlaneseq
      %v220 = vand.u32 %v219, 127
      %221 = vset.pattern.permute.xlu0 0
      %222 = vperm.xlu0 %221, %v212
      %v223 = vpop.permute.xlu0 %222
      %224 = vset.pattern.permute.xlu0 0
      %225 = vperm.xlu0 %224, %v214
      %v226 = vpop.permute.xlu0 %225
      %227 = vset.pattern.permute.xlu0 0
      %228 = vperm.xlu0 %227, %v216
      %v229 = vpop.permute.xlu0 %228
      %230 = vset.pattern.permute.xlu0 0
      %231 = vperm.xlu0 %230, %v218
      %v232 = vpop.permute.xlu0 %231
      %vm233 = vcmp.eq.s32.totalorder %v223, %v220
      %vm234 = vcmp.eq.s32.totalorder %v226, %v220
      %vm235 = vcmp.eq.s32.totalorder %v229, %v220
      %vm236 = vcmp.eq.s32.totalorder %v232, %v220
      %v237 = vsel %vm233, 1, 0
      %v238 = vsel %vm234, 1, 0
      %v239 = vsel %vm235, 1, 0
      %v240 = vsel %vm236, 1, 0
      %v241 = vcvt.s32.f32 %v237
      %v242 = vcvt.s32.f32 %v238
      %v243 = vcvt.s32.f32 %v239
      %v244 = vcvt.s32.f32 %v240
      %v245 = vld [vmem:[%s2 + $0x40] sm:$0xff]
      %v246 = vld [vmem:[%s2 + $0x48] sm:$0xff]
      %v247 = vld [vmem:[%s2 + $0x50] sm:$0xff]
      %v248 = vld [vmem:[%s2 + $0x58] sm:$0xff]
      %v249 = vld [vmem:[%s2 + $0x60] sm:$0xff]
      %v250 = vld [vmem:[%s2 + $0x68] sm:$0xff]
      %v251 = vld [vmem:[%s2 + $0x70] sm:$0xff]
      %v252 = vld [vmem:[%s2 + $0x78] sm:$0xff]
      %vm253 = vcmask 523264
      %v255 = vsel %vm253, %v241, 0
      %v258 = vsel %vm253, %v242, 0
      %v261 = vsel %vm253, %v243, 0
      %v264 = vsel %vm253, %v244, 0
      %266 = vmatprep.subr.mxu0 0.0
      %267 = vmatpush1.msra.mxu0 %v245
      %268 = vmatprep.subr.mxu0 0.0
      %269 = vmatpush1.msra.mxu0 %v246
      %270 = vmatprep.subr.mxu0 0.0
      %271 = vmatpush1.msra.mxu0 %v247
      %272 = vmatprep.subr.mxu0 0.0
      %273 = vmatpush1.msra.mxu0 %v248
      %274 = vmatprep.subr.mxu0 0.0
      %275 = vmatpush1.msra.mxu0 %v249
      %276 = vmatprep.subr.mxu0 0.0
      %277 = vmatpush1.msra.mxu0 %v250
      %278 = vmatprep.subr.mxu0 0.0
      %279 = vmatpush1.msra.mxu0 %v251
      %280 = vmatprep.subr.mxu0 0.0
      %281 = vmatpush1.msra.mxu0 %v252
      %282 = vmatprep.subr.mxu0 0.0
      %283 = vmatpush1.msra.mxu0 0.0
      %284 = vmatprep.subr.mxu0 0.0
      %285 = vmatpush1.msra.mxu0 0.0
      %286 = vmatprep.subr.mxu0 0.0
      %287 = vmatpush1.msra.mxu0 0.0
      %288 = vmatprep.subr.mxu0 0.0
      %289 = vmatpush1.msra.mxu0 0.0
      %290 = vmatprep.subr.mxu0 0.0
      %291 = vmatpush1.msra.mxu0 0.0
      %292 = vmatprep.subr.mxu0 0.0
      %293 = vmatpush1.msra.mxu0 0.0
      %294 = vmatprep.subr.mxu0 0.0
      %295 = vmatpush1.msra.mxu0 0.0
      %296 = vmatprep.subr.mxu0 0.0
      %297 = vmatpush1.msra.mxu0 0.0
      %298 = vmatprep.subr.mxu0 0.0
      %299 = vmatpush1.msra.mxu0 0.0
      %300 = vmatprep.subr.mxu0 0.0
      %301 = vmatpush1.msra.mxu0 0.0
      %302 = vmatprep.subr.mxu0 0.0
      %303 = vmatpush1.msra.mxu0 0.0
      %304 = vmatprep.subr.mxu0 0.0
      %305 = vmatpush1.msra.mxu0 0.0
      %306 = vmatprep.subr.mxu0 0.0
      %307 = vmatpush1.msra.mxu0 0.0
      %308 = vmatprep.subr.mxu0 0.0
      %309 = vmatpush1.msra.mxu0 0.0
      %310 = vmatprep.subr.mxu0 0.0
      %311 = vmatpush1.msra.mxu0 0.0
      %312 = vmatprep.subr.mxu0 0.0
      %313 = vmatpush1.msra.mxu0 0.0
      %314 = vmatprep.subr.mxu0 0.0
      %315 = vmatpush1.msra.mxu0 0.0
      %316 = vmatprep.subr.mxu0 0.0
      %317 = vmatpush1.msra.mxu0 0.0
      %318 = vmatprep.subr.mxu0 0.0
      %319 = vmatpush1.msra.mxu0 0.0
      %320 = vmatprep.subr.mxu0 0.0
      %321 = vmatpush1.msra.mxu0 0.0
      %322 = vmatprep.subr.mxu0 0.0
      %323 = vmatpush1.msra.mxu0 0.0
      %324 = vmatprep.subr.mxu0 0.0
      %325 = vmatpush1.msra.mxu0 0.0
      %326 = vmatprep.subr.mxu0 0.0
      %327 = vmatpush1.msra.mxu0 0.0
      %328 = vmatprep.subr.mxu0 0.0
      %329 = vmatpush1.msra.mxu0 0.0
      %330 = vmatprep.mubr.f32.mxu0 0.0
      %331 = vmatmul.mubr.f32.gmra.mrb[0].mxu0 %v255
      %v332 = vpop.f32.mrb[0].mxu0
      %v333 = vadd.f32 0.0, %v332
      %v334 = vpop.f32.mrb[0].mxu0
      %335 = vmatprep.mubr.f32.mxu0 0.0
      %336 = vmatmul.mubr.f32.gmra.mrb[0].mxu0 %v258
      %v337 = vpop.f32.mrb[0].mxu0
      %v338 = vadd.f32 0.0, %v337
      %v339 = vpop.f32.mrb[0].mxu0
      %340 = vmatprep.mubr.f32.mxu0 0.0
      %341 = vmatmul.mubr.f32.gmra.mrb[0].mxu0 %v261
      %v342 = vpop.f32.mrb[0].mxu0
      %v343 = vadd.f32 0.0, %v342
      %v344 = vpop.f32.mrb[0].mxu0
      %345 = vmatprep.mubr.f32.mxu0 0.0
      %346 = vmatmul.mubr.f32.gmra.mrb[0].mxu0 %v264
      %v347 = vpop.f32.mrb[0].mxu0
      %v348 = vadd.f32 0.0, %v347
      %v349 = vpop.f32.mrb[0].mxu0
      %350 = vdwg.mxu0
      %v351 = vld [vmem:[%s2 + $0x80] sm:$0xff]
      %v352 = vld [vmem:[%s2 + $0x88] sm:$0xff]
      %v353 = vld [vmem:[%s2 + $0x90] sm:$0xff]
      %v354 = vld [vmem:[%s2 + $0x98] sm:$0xff]
      %v355 = vld [vmem:[%s2 + $0xa0] sm:$0xff]
      %v356 = vld [vmem:[%s2 + $0xa8] sm:$0xff]
      %v357 = vld [vmem:[%s2 + $0xb0] sm:$0xff]
      %v358 = vld [vmem:[%s2 + $0xb8] sm:$0xff]
      %v359 = vld [vmem:[%s2 + $0x2c0] sm:$0x1]
      %v360 = vlaneseq
      %v361 = vshrl.u32 %v360, 7
      %v362 = vsub.s32 0, %v361
      %v363 = vrot.slane %v359, %v362
      %v365 = vsel %vm253, %v191, 0
      %v368 = vsel %vm253, %v192, 0
      %v371 = vsel %vm253, %v193, 0
      %v374 = vsel %vm253, %v194, 0
      %376 = vmatprep.subr.mxu0 0.0
      %377 = vmatpush1.msra.mxu0 %v351
      %378 = vmatprep.subr.mxu0 0.0
      %379 = vmatpush1.msra.mxu0 %v352
      %380 = vmatprep.subr.mxu0 0.0
      %381 = vmatpush1.msra.mxu0 %v353
      %382 = vmatprep.subr.mxu0 0.0
      %383 = vmatpush1.msra.mxu0 %v354
      %384 = vmatprep.subr.mxu0 0.0
      %385 = vmatpush1.msra.mxu0 %v355
      %386 = vmatprep.subr.mxu0 0.0
      %387 = vmatpush1.msra.mxu0 %v356
      %388 = vmatprep.subr.mxu0 0.0
      %389 = vmatpush1.msra.mxu0 %v357
      %390 = vmatprep.subr.mxu0 0.0
      %391 = vmatpush1.msra.mxu0 %v358
      %392 = vmatprep.subr.mxu0 0.0
      %393 = vmatpush1.msra.mxu0 0.0
      %394 = vmatprep.subr.mxu0 0.0
      %395 = vmatpush1.msra.mxu0 0.0
      %396 = vmatprep.subr.mxu0 0.0
      %397 = vmatpush1.msra.mxu0 0.0
      %398 = vmatprep.subr.mxu0 0.0
      %399 = vmatpush1.msra.mxu0 0.0
      %400 = vmatprep.subr.mxu0 0.0
      %401 = vmatpush1.msra.mxu0 0.0
      %402 = vmatprep.subr.mxu0 0.0
      %403 = vmatpush1.msra.mxu0 0.0
      %404 = vmatprep.subr.mxu0 0.0
      %405 = vmatpush1.msra.mxu0 0.0
      %406 = vmatprep.subr.mxu0 0.0
      %407 = vmatpush1.msra.mxu0 0.0
      %408 = vmatprep.subr.mxu0 0.0
      %409 = vmatpush1.msra.mxu0 0.0
      %410 = vmatprep.subr.mxu0 0.0
      %411 = vmatpush1.msra.mxu0 0.0
      %412 = vmatprep.subr.mxu0 0.0
      %413 = vmatpush1.msra.mxu0 0.0
      %414 = vmatprep.subr.mxu0 0.0
      %415 = vmatpush1.msra.mxu0 0.0
      %416 = vmatprep.subr.mxu0 0.0
      %417 = vmatpush1.msra.mxu0 0.0
      %418 = vmatprep.subr.mxu0 0.0
      %419 = vmatpush1.msra.mxu0 0.0
      %420 = vmatprep.subr.mxu0 0.0
      %421 = vmatpush1.msra.mxu0 0.0
      %422 = vmatprep.subr.mxu0 0.0
      %423 = vmatpush1.msra.mxu0 0.0
      %424 = vmatprep.subr.mxu0 0.0
      %425 = vmatpush1.msra.mxu0 0.0
      %426 = vmatprep.subr.mxu0 0.0
      %427 = vmatpush1.msra.mxu0 0.0
      %428 = vmatprep.subr.mxu0 0.0
      %429 = vmatpush1.msra.mxu0 0.0
      %430 = vmatprep.subr.mxu0 0.0
      %431 = vmatpush1.msra.mxu0 0.0
      %432 = vmatprep.subr.mxu0 0.0
      %433 = vmatpush1.msra.mxu0 0.0
      %434 = vmatprep.subr.mxu0 0.0
      %435 = vmatpush1.msra.mxu0 0.0
      %436 = vmatprep.subr.mxu0 0.0
      %437 = vmatpush1.msra.mxu0 0.0
      %438 = vmatprep.subr.mxu0 0.0
      %439 = vmatpush1.msra.mxu0 0.0
      %440 = vmatprep.mubr.f32.mxu0 0.0
      %441 = vmatmul.mubr.f32.gmra.mrb[0].mxu0 %v365
      %v442 = vpop.f32.mrb[0].mxu0
      %v443 = vadd.f32 %v363, %v442
      %v444 = vpop.f32.mrb[0].mxu0
      %445 = vmatprep.mubr.f32.mxu0 0.0
      %446 = vmatmul.mubr.f32.gmra.mrb[0].mxu0 %v368
      %v447 = vpop.f32.mrb[0].mxu0
      %v448 = vadd.f32 %v363, %v447
      %v449 = vpop.f32.mrb[0].mxu0
      %450 = vmatprep.mubr.f32.mxu0 0.0
      %451 = vmatmul.mubr.f32.gmra.mrb[0].mxu0 %v371
      %v452 = vpop.f32.mrb[0].mxu0
      %v453 = vadd.f32 %v363, %v452
      %v454 = vpop.f32.mrb[0].mxu0
      %455 = vmatprep.mubr.f32.mxu0 0.0
      %456 = vmatmul.mubr.f32.gmra.mrb[0].mxu0 %v374
      %v457 = vpop.f32.mrb[0].mxu0
      %v458 = vadd.f32 %v363, %v457
      %v459 = vpop.f32.mrb[0].mxu0
      %460 = vdwg.mxu0
      %v461 = vmax.f32 %v443, 0.0
      %v462 = vmax.f32 %v448, 0.0
      %v463 = vmax.f32 %v453, 0.0
      %v464 = vmax.f32 %v458, 0.0
      %v465 = vld [vmem:[%s2 + $0xc0] sm:$0xff]
      %v466 = vld [vmem:[%s2 + $0xc8] sm:$0xff]
      %v467 = vld [vmem:[%s2 + $0xd0] sm:$0xff]
      %v468 = vld [vmem:[%s2 + $0xd8] sm:$0xff]
      %v469 = vld [vmem:[%s2 + $0xe0] sm:$0xff]
      %v470 = vld [vmem:[%s2 + $0xe8] sm:$0xff]
      %v471 = vld [vmem:[%s2 + $0xf0] sm:$0xff]
      %v472 = vld [vmem:[%s2 + $0xf8] sm:$0xff]
      %v473 = vld [vmem:[%s2 + $0x2c1] sm:$0x1]
      %v474 = vlaneseq
      %v475 = vshrl.u32 %v474, 7
      %v476 = vsub.s32 0, %v475
      %v477 = vrot.slane %v473, %v476
      %v479 = vsel %vm253, %v461, 0
      %v482 = vsel %vm253, %v462, 0
      %v485 = vsel %vm253, %v463, 0
      %v488 = vsel %vm253, %v464, 0
      %490 = vmatprep.subr.mxu0 0.0
      %491 = vmatpush1.msra.mxu0 %v465
      %492 = vmatprep.subr.mxu0 0.0
      %493 = vmatpush1.msra.mxu0 %v466
      %494 = vmatprep.subr.mxu0 0.0
      %495 = vmatpush1.msra.mxu0 %v467
      %496 = vmatprep.subr.mxu0 0.0
      %497 = vmatpush1.msra.mxu0 %v468
      %498 = vmatprep.subr.mxu0 0.0
      %499 = vmatpush1.msra.mxu0 %v469
      %500 = vmatprep.subr.mxu0 0.0
      %501 = vmatpush1.msra.mxu0 %v470
      %502 = vmatprep.subr.mxu0 0.0
      %503 = vmatpush1.msra.mxu0 %v471
      %504 = vmatprep.subr.mxu0 0.0
      %505 = vmatpush1.msra.mxu0 %v472
      %506 = vmatprep.subr.mxu0 0.0
      %507 = vmatpush1.msra.mxu0 0.0
      %508 = vmatprep.subr.mxu0 0.0
      %509 = vmatpush1.msra.mxu0 0.0
      %510 = vmatprep.subr.mxu0 0.0
      %511 = vmatpush1.msra.mxu0 0.0
      %512 = vmatprep.subr.mxu0 0.0
      %513 = vmatpush1.msra.mxu0 0.0
      %514 = vmatprep.subr.mxu0 0.0
      %515 = vmatpush1.msra.mxu0 0.0
      %516 = vmatprep.subr.mxu0 0.0
      %517 = vmatpush1.msra.mxu0 0.0
      %518 = vmatprep.subr.mxu0 0.0
      %519 = vmatpush1.msra.mxu0 0.0
      %520 = vmatprep.subr.mxu0 0.0
      %521 = vmatpush1.msra.mxu0 0.0
      %522 = vmatprep.subr.mxu0 0.0
      %523 = vmatpush1.msra.mxu0 0.0
      %524 = vmatprep.subr.mxu0 0.0
      %525 = vmatpush1.msra.mxu0 0.0
      %526 = vmatprep.subr.mxu0 0.0
      %527 = vmatpush1.msra.mxu0 0.0
      %528 = vmatprep.subr.mxu0 0.0
      %529 = vmatpush1.msra.mxu0 0.0
      %530 = vmatprep.subr.mxu0 0.0
      %531 = vmatpush1.msra.mxu0 0.0
      %532 = vmatprep.subr.mxu0 0.0
      %533 = vmatpush1.msra.mxu0 0.0
      %534 = vmatprep.subr.mxu0 0.0
      %535 = vmatpush1.msra.mxu0 0.0
      %536 = vmatprep.subr.mxu0 0.0
      %537 = vmatpush1.msra.mxu0 0.0
      %538 = vmatprep.subr.mxu0 0.0
      %539 = vmatpush1.msra.mxu0 0.0
      %540 = vmatprep.subr.mxu0 0.0
      %541 = vmatpush1.msra.mxu0 0.0
      %542 = vmatprep.subr.mxu0 0.0
      %543 = vmatpush1.msra.mxu0 0.0
      %544 = vmatprep.subr.mxu0 0.0
      %545 = vmatpush1.msra.mxu0 0.0
      %546 = vmatprep.subr.mxu0 0.0
      %547 = vmatpush1.msra.mxu0 0.0
      %548 = vmatprep.subr.mxu0 0.0
      %549 = vmatpush1.msra.mxu0 0.0
      %550 = vmatprep.subr.mxu0 0.0
      %551 = vmatpush1.msra.mxu0 0.0
      %552 = vmatprep.subr.mxu0 0.0
      %553 = vmatpush1.msra.mxu0 0.0
      %554 = vmatprep.mubr.f32.mxu0 0.0
      %555 = vmatmul.mubr.f32.gmra.mrb[0].mxu0 %v479
      %v556 = vpop.f32.mrb[0].mxu0
      %v557 = vadd.f32 %v477, %v556
      %v558 = vpop.f32.mrb[0].mxu0
      %559 = vmatprep.mubr.f32.mxu0 0.0
      %560 = vmatmul.mubr.f32.gmra.mrb[0].mxu0 %v482
      %v561 = vpop.f32.mrb[0].mxu0
      %v562 = vadd.f32 %v477, %v561
      %v563 = vpop.f32.mrb[0].mxu0
      %564 = vmatprep.mubr.f32.mxu0 0.0
      %565 = vmatmul.mubr.f32.gmra.mrb[0].mxu0 %v485
      %v566 = vpop.f32.mrb[0].mxu0
      %v567 = vadd.f32 %v477, %v566
      %v568 = vpop.f32.mrb[0].mxu0
      %569 = vmatprep.mubr.f32.mxu0 0.0
      %570 = vmatmul.mubr.f32.gmra.mrb[0].mxu0 %v488
      %v571 = vpop.f32.mrb[0].mxu0
      %v572 = vadd.f32 %v477, %v571
      %v573 = vpop.f32.mrb[0].mxu0
      %574 = vdwg.mxu0
      %v575 = vadd.f32 %v557, %v333
      %v576 = vadd.f32 %v562, %v338
      %v577 = vadd.f32 %v567, %v343
      %v578 = vadd.f32 %v572, %v348
      %v579 = vld [vmem:[%s2 + $0x100] sm:$0xff]
      %v580 = vld [vmem:[%s2 + $0x108] sm:$0xff]
      %v581 = vld [vmem:[%s2 + $0x110] sm:$0xff]
      %v582 = vld [vmem:[%s2 + $0x118] sm:$0xff]
      %v583 = vld [vmem:[%s2 + $0x120] sm:$0xff]
      %v584 = vld [vmem:[%s2 + $0x128] sm:$0xff]
      %v585 = vld [vmem:[%s2 + $0x130] sm:$0xff]
      %v586 = vld [vmem:[%s2 + $0x138] sm:$0xff]
      %v587 = vld [vmem:[%s2 + $0x2c2] sm:$0x1]
      %v588 = vlaneseq
      %v589 = vshrl.u32 %v588, 7
      %v590 = vsub.s32 0, %v589
      %v591 = vrot.slane %v587, %v590
      %v593 = vsel %vm253, %v575, 0
      %v596 = vsel %vm253, %v576, 0
      %v599 = vsel %vm253, %v577, 0
      %v602 = vsel %vm253, %v578, 0
      %604 = vmatprep.subr.mxu0 0.0
      %605 = vmatpush1.msra.mxu0 %v579
      %606 = vmatprep.subr.mxu0 0.0
      %607 = vmatpush1.msra.mxu0 %v580
      %608 = vmatprep.subr.mxu0 0.0
      %609 = vmatpush1.msra.mxu0 %v581
      %610 = vmatprep.subr.mxu0 0.0
      %611 = vmatpush1.msra.mxu0 %v582
      %612 = vmatprep.subr.mxu0 0.0
      %613 = vmatpush1.msra.mxu0 %v583
      %614 = vmatprep.subr.mxu0 0.0
      %615 = vmatpush1.msra.mxu0 %v584
      %616 = vmatprep.subr.mxu0 0.0
      %617 = vmatpush1.msra.mxu0 %v585
      %618 = vmatprep.subr.mxu0 0.0
      %619 = vmatpush1.msra.mxu0 %v586
      %620 = vmatprep.subr.mxu0 0.0
      %621 = vmatpush1.msra.mxu0 0.0
      %622 = vmatprep.subr.mxu0 0.0
      %623 = vmatpush1.msra.mxu0 0.0
      %624 = vmatprep.subr.mxu0 0.0
      %625 = vmatpush1.msra.mxu0 0.0
      %626 = vmatprep.subr.mxu0 0.0
      %627 = vmatpush1.msra.mxu0 0.0
      %628 = vmatprep.subr.mxu0 0.0
      %629 = vmatpush1.msra.mxu0 0.0
      %630 = vmatprep.subr.mxu0 0.0
      %631 = vmatpush1.msra.mxu0 0.0
      %632 = vmatprep.subr.mxu0 0.0
      %633 = vmatpush1.msra.mxu0 0.0
      %634 = vmatprep.subr.mxu0 0.0
      %635 = vmatpush1.msra.mxu0 0.0
      %636 = vmatprep.subr.mxu0 0.0
      %637 = vmatpush1.msra.mxu0 0.0
      %638 = vmatprep.subr.mxu0 0.0
      %639 = vmatpush1.msra.mxu0 0.0
      %640 = vmatprep.subr.mxu0 0.0
      %641 = vmatpush1.msra.mxu0 0.0
      %642 = vmatprep.subr.mxu0 0.0
      %643 = vmatpush1.msra.mxu0 0.0
      %644 = vmatprep.subr.mxu0 0.0
      %645 = vmatpush1.msra.mxu0 0.0
      %646 = vmatprep.subr.mxu0 0.0
      %647 = vmatpush1.msra.mxu0 0.0
      %648 = vmatprep.subr.mxu0 0.0
      %649 = vmatpush1.msra.mxu0 0.0
      %650 = vmatprep.subr.mxu0 0.0
      %651 = vmatpush1.msra.mxu0 0.0
      %652 = vmatprep.subr.mxu0 0.0
      %653 = vmatpush1.msra.mxu0 0.0
      %654 = vmatprep.subr.mxu0 0.0
      %655 = vmatpush1.msra.mxu0 0.0
      %656 = vmatprep.subr.mxu0 0.0
      %657 = vmatpush1.msra.mxu0 0.0
      %658 = vmatprep.subr.mxu0 0.0
      %659 = vmatpush1.msra.mxu0 0.0
      %660 = vmatprep.subr.mxu0 0.0
      %661 = vmatpush1.msra.mxu0 0.0
      %662 = vmatprep.subr.mxu0 0.0
      %663 = vmatpush1.msra.mxu0 0.0
      %664 = vmatprep.subr.mxu0 0.0
      %665 = vmatpush1.msra.mxu0 0.0
      %666 = vmatprep.subr.mxu0 0.0
      %667 = vmatpush1.msra.mxu0 0.0
      %668 = vmatprep.mubr.f32.mxu0 0.0
      %669 = vmatmul.mubr.f32.gmra.mrb[0].mxu0 %v593
      %v670 = vpop.f32.mrb[0].mxu0
      %v671 = vadd.f32 %v591, %v670
      %v672 = vpop.f32.mrb[0].mxu0
      %673 = vmatprep.mubr.f32.mxu0 0.0
      %674 = vmatmul.mubr.f32.gmra.mrb[0].mxu0 %v596
      %v675 = vpop.f32.mrb[0].mxu0
      %v676 = vadd.f32 %v591, %v675
      %v677 = vpop.f32.mrb[0].mxu0
      %678 = vmatprep.mubr.f32.mxu0 0.0
      %679 = vmatmul.mubr.f32.gmra.mrb[0].mxu0 %v599
      %v680 = vpop.f32.mrb[0].mxu0
      %v681 = vadd.f32 %v591, %v680
      %v682 = vpop.f32.mrb[0].mxu0
      %683 = vmatprep.mubr.f32.mxu0 0.0
      %684 = vmatmul.mubr.f32.gmra.mrb[0].mxu0 %v602
      %v685 = vpop.f32.mrb[0].mxu0
      %v686 = vadd.f32 %v591, %v685
      %v687 = vpop.f32.mrb[0].mxu0
      %688 = vdwg.mxu0
      %v689 = vmax.f32 %v671, 0.0
      %v690 = vmax.f32 %v676, 0.0
      %v691 = vmax.f32 %v681, 0.0
      %v692 = vmax.f32 %v686, 0.0
      %v693 = vld [vmem:[%s2 + $0x140] sm:$0xff]
      %v694 = vld [vmem:[%s2 + $0x148] sm:$0xff]
      %v695 = vld [vmem:[%s2 + $0x150] sm:$0xff]
      %v696 = vld [vmem:[%s2 + $0x158] sm:$0xff]
      %v697 = vld [vmem:[%s2 + $0x160] sm:$0xff]
      %v698 = vld [vmem:[%s2 + $0x168] sm:$0xff]
      %v699 = vld [vmem:[%s2 + $0x170] sm:$0xff]
      %v700 = vld [vmem:[%s2 + $0x178] sm:$0xff]
      %v701 = vld [vmem:[%s2 + $0x2c3] sm:$0x1]
      %v702 = vlaneseq
      %v703 = vshrl.u32 %v702, 7
      %v704 = vsub.s32 0, %v703
      %v705 = vrot.slane %v701, %v704
      %v707 = vsel %vm253, %v689, 0
      %v710 = vsel %vm253, %v690, 0
      %v713 = vsel %vm253, %v691, 0
      %v716 = vsel %vm253, %v692, 0
      %718 = vmatprep.subr.mxu0 0.0
      %719 = vmatpush1.msra.mxu0 %v693
      %720 = vmatprep.subr.mxu0 0.0
      %721 = vmatpush1.msra.mxu0 %v694
      %722 = vmatprep.subr.mxu0 0.0
      %723 = vmatpush1.msra.mxu0 %v695
      %724 = vmatprep.subr.mxu0 0.0
      %725 = vmatpush1.msra.mxu0 %v696
      %726 = vmatprep.subr.mxu0 0.0
      %727 = vmatpush1.msra.mxu0 %v697
      %728 = vmatprep.subr.mxu0 0.0
      %729 = vmatpush1.msra.mxu0 %v698
      %730 = vmatprep.subr.mxu0 0.0
      %731 = vmatpush1.msra.mxu0 %v699
      %732 = vmatprep.subr.mxu0 0.0
      %733 = vmatpush1.msra.mxu0 %v700
      %734 = vmatprep.subr.mxu0 0.0
      %735 = vmatpush1.msra.mxu0 0.0
      %736 = vmatprep.subr.mxu0 0.0
      %737 = vmatpush1.msra.mxu0 0.0
      %738 = vmatprep.subr.mxu0 0.0
      %739 = vmatpush1.msra.mxu0 0.0
      %740 = vmatprep.subr.mxu0 0.0
      %741 = vmatpush1.msra.mxu0 0.0
      %742 = vmatprep.subr.mxu0 0.0
      %743 = vmatpush1.msra.mxu0 0.0
      %744 = vmatprep.subr.mxu0 0.0
      %745 = vmatpush1.msra.mxu0 0.0
      %746 = vmatprep.subr.mxu0 0.0
      %747 = vmatpush1.msra.mxu0 0.0
      %748 = vmatprep.subr.mxu0 0.0
      %749 = vmatpush1.msra.mxu0 0.0
      %750 = vmatprep.subr.mxu0 0.0
      %751 = vmatpush1.msra.mxu0 0.0
      %752 = vmatprep.subr.mxu0 0.0
      %753 = vmatpush1.msra.mxu0 0.0
      %754 = vmatprep.subr.mxu0 0.0
      %755 = vmatpush1.msra.mxu0 0.0
      %756 = vmatprep.subr.mxu0 0.0
      %757 = vmatpush1.msra.mxu0 0.0
      %758 = vmatprep.subr.mxu0 0.0
      %759 = vmatpush1.msra.mxu0 0.0
      %760 = vmatprep.subr.mxu0 0.0
      %761 = vmatpush1.msra.mxu0 0.0
      %762 = vmatprep.subr.mxu0 0.0
      %763 = vmatpush1.msra.mxu0 0.0
      %764 = vmatprep.subr.mxu0 0.0
      %765 = vmatpush1.msra.mxu0 0.0
      %766 = vmatprep.subr.mxu0 0.0
      %767 = vmatpush1.msra.mxu0 0.0
      %768 = vmatprep.subr.mxu0 0.0
      %769 = vmatpush1.msra.mxu0 0.0
      %770 = vmatprep.subr.mxu0 0.0
      %771 = vmatpush1.msra.mxu0 0.0
      %772 = vmatprep.subr.mxu0 0.0
      %773 = vmatpush1.msra.mxu0 0.0
      %774 = vmatprep.subr.mxu0 0.0
      %775 = vmatpush1.msra.mxu0 0.0
      %776 = vmatprep.subr.mxu0 0.0
      %777 = vmatpush1.msra.mxu0 0.0
      %778 = vmatprep.subr.mxu0 0.0
      %779 = vmatpush1.msra.mxu0 0.0
      %780 = vmatprep.subr.mxu0 0.0
      %781 = vmatpush1.msra.mxu0 0.0
      %782 = vmatprep.mubr.f32.mxu0 0.0
      %783 = vmatmul.mubr.f32.gmra.mrb[0].mxu0 %v707
      %v784 = vpop.f32.mrb[0].mxu0
      %v785 = vadd.f32 %v705, %v784
      %v786 = vpop.f32.mrb[0].mxu0
      %787 = vmatprep.mubr.f32.mxu0 0.0
      %788 = vmatmul.mubr.f32.gmra.mrb[0].mxu0 %v710
      %v789 = vpop.f32.mrb[0].mxu0
      %v790 = vadd.f32 %v705, %v789
      %v791 = vpop.f32.mrb[0].mxu0
      %792 = vmatprep.mubr.f32.mxu0 0.0
      %793 = vmatmul.mubr.f32.gmra.mrb[0].mxu0 %v713
      %v794 = vpop.f32.mrb[0].mxu0
      %v795 = vadd.f32 %v705, %v794
      %v796 = vpop.f32.mrb[0].mxu0
      %797 = vmatprep.mubr.f32.mxu0 0.0
      %798 = vmatmul.mubr.f32.gmra.mrb[0].mxu0 %v716
      %v799 = vpop.f32.mrb[0].mxu0
      %v800 = vadd.f32 %v705, %v799
      %v801 = vpop.f32.mrb[0].mxu0
      %802 = vdwg.mxu0
      %v803 = vmax.f32 %v785, 0.0
      %v804 = vmax.f32 %v790, 0.0
      %v805 = vmax.f32 %v795, 0.0
      %v806 = vmax.f32 %v800, 0.0
      %v807 = vld [vmem:[%s2 + $0x180] sm:$0xff]
      %v808 = vld [vmem:[%s2 + $0x188] sm:$0xff]
      %v809 = vld [vmem:[%s2 + $0x190] sm:$0xff]
      %v810 = vld [vmem:[%s2 + $0x198] sm:$0xff]
      %v811 = vld [vmem:[%s2 + $0x1a0] sm:$0xff]
      %v812 = vld [vmem:[%s2 + $0x1a8] sm:$0xff]
      %v813 = vld [vmem:[%s2 + $0x1b0] sm:$0xff]
      %v814 = vld [vmem:[%s2 + $0x1b8] sm:$0xff]
      %v815 = vld [vmem:[%s2 + $0x2c4] sm:$0x1]
      %v816 = vlaneseq
      %v817 = vshrl.u32 %v816, 7
      %v818 = vsub.s32 0, %v817
      %v819 = vrot.slane %v815, %v818
      %v821 = vsel %vm253, %v803, 0
      %v824 = vsel %vm253, %v804, 0
      %v827 = vsel %vm253, %v805, 0
      %v830 = vsel %vm253, %v806, 0
      %832 = vmatprep.subr.mxu0 0.0
      %833 = vmatpush1.msra.mxu0 %v807
      %834 = vmatprep.subr.mxu0 0.0
      %835 = vmatpush1.msra.mxu0 %v808
      %836 = vmatprep.subr.mxu0 0.0
      %837 = vmatpush1.msra.mxu0 %v809
      %838 = vmatprep.subr.mxu0 0.0
      %839 = vmatpush1.msra.mxu0 %v810
      %840 = vmatprep.subr.mxu0 0.0
      %841 = vmatpush1.msra.mxu0 %v811
      %842 = vmatprep.subr.mxu0 0.0
      %843 = vmatpush1.msra.mxu0 %v812
      %844 = vmatprep.subr.mxu0 0.0
      %845 = vmatpush1.msra.mxu0 %v813
      %846 = vmatprep.subr.mxu0 0.0
      %847 = vmatpush1.msra.mxu0 %v814
      %848 = vmatprep.subr.mxu0 0.0
      %849 = vmatpush1.msra.mxu0 0.0
      %850 = vmatprep.subr.mxu0 0.0
      %851 = vmatpush1.msra.mxu0 0.0
      %852 = vmatprep.subr.mxu0 0.0
      %853 = vmatpush1.msra.mxu0 0.0
      %854 = vmatprep.subr.mxu0 0.0
      %855 = vmatpush1.msra.mxu0 0.0
      %856 = vmatprep.subr.mxu0 0.0
      %857 = vmatpush1.msra.mxu0 0.0
      %858 = vmatprep.subr.mxu0 0.0
      %859 = vmatpush1.msra.mxu0 0.0
      %860 = vmatprep.subr.mxu0 0.0
      %861 = vmatpush1.msra.mxu0 0.0
      %862 = vmatprep.subr.mxu0 0.0
      %863 = vmatpush1.msra.mxu0 0.0
      %864 = vmatprep.subr.mxu0 0.0
      %865 = vmatpush1.msra.mxu0 0.0
      %866 = vmatprep.subr.mxu0 0.0
      %867 = vmatpush1.msra.mxu0 0.0
      %868 = vmatprep.subr.mxu0 0.0
      %869 = vmatpush1.msra.mxu0 0.0
      %870 = vmatprep.subr.mxu0 0.0
      %871 = vmatpush1.msra.mxu0 0.0
      %872 = vmatprep.subr.mxu0 0.0
      %873 = vmatpush1.msra.mxu0 0.0
      %874 = vmatprep.subr.mxu0 0.0
      %875 = vmatpush1.msra.mxu0 0.0
      %876 = vmatprep.subr.mxu0 0.0
      %877 = vmatpush1.msra.mxu0 0.0
      %878 = vmatprep.subr.mxu0 0.0
      %879 = vmatpush1.msra.mxu0 0.0
      %880 = vmatprep.subr.mxu0 0.0
      %881 = vmatpush1.msra.mxu0 0.0
      %882 = vmatprep.subr.mxu0 0.0
      %883 = vmatpush1.msra.mxu0 0.0
      %884 = vmatprep.subr.mxu0 0.0
      %885 = vmatpush1.msra.mxu0 0.0
      %886 = vmatprep.subr.mxu0 0.0
      %887 = vmatpush1.msra.mxu0 0.0
      %888 = vmatprep.subr.mxu0 0.0
      %889 = vmatpush1.msra.mxu0 0.0
      %890 = vmatprep.subr.mxu0 0.0
      %891 = vmatpush1.msra.mxu0 0.0
      %892 = vmatprep.subr.mxu0 0.0
      %893 = vmatpush1.msra.mxu0 0.0
      %894 = vmatprep.subr.mxu0 0.0
      %895 = vmatpush1.msra.mxu0 0.0
      %896 = vmatprep.mubr.f32.mxu0 0.0
      %897 = vmatmul.mubr.f32.gmra.mrb[0].mxu0 %v821
      %v898 = vpop.f32.mrb[0].mxu0
      %v899 = vadd.f32 %v819, %v898
      %v900 = vpop.f32.mrb[0].mxu0
      %901 = vmatprep.mubr.f32.mxu0 0.0
      %902 = vmatmul.mubr.f32.gmra.mrb[0].mxu0 %v824
      %v903 = vpop.f32.mrb[0].mxu0
      %v904 = vadd.f32 %v819, %v903
      %v905 = vpop.f32.mrb[0].mxu0
      %906 = vmatprep.mubr.f32.mxu0 0.0
      %907 = vmatmul.mubr.f32.gmra.mrb[0].mxu0 %v827
      %v908 = vpop.f32.mrb[0].mxu0
      %v909 = vadd.f32 %v819, %v908
      %v910 = vpop.f32.mrb[0].mxu0
      %911 = vmatprep.mubr.f32.mxu0 0.0
      %912 = vmatmul.mubr.f32.gmra.mrb[0].mxu0 %v830
      %v913 = vpop.f32.mrb[0].mxu0
      %v914 = vadd.f32 %v819, %v913
      %v915 = vpop.f32.mrb[0].mxu0
      %916 = vdwg.mxu0
      %v917 = vld [vmem:[%s2 + $0x1c0] sm:$0xff]
      %v918 = vld [vmem:[%s2 + $0x1c8] sm:$0xff]
      %v919 = vld [vmem:[%s2 + $0x1d0] sm:$0xff]
      %v920 = vld [vmem:[%s2 + $0x1d8] sm:$0xff]
      %v921 = vld [vmem:[%s2 + $0x1e0] sm:$0xff]
      %v922 = vld [vmem:[%s2 + $0x1e8] sm:$0xff]
      %v923 = vld [vmem:[%s2 + $0x1f0] sm:$0xff]
      %v924 = vld [vmem:[%s2 + $0x1f8] sm:$0xff]
      %v925 = vld [vmem:[%s2 + $0x2c5] sm:$0x1]
      %v926 = vlaneseq
      %v927 = vshrl.u32 %v926, 7
      %v928 = vsub.s32 0, %v927
      %v929 = vrot.slane %v925, %v928
      %v931 = vsel %vm253, %v899, 0
      %v934 = vsel %vm253, %v904, 0
      %v937 = vsel %vm253, %v909, 0
      %v940 = vsel %vm253, %v914, 0
      %942 = vmatprep.subr.mxu0 0.0
      %943 = vmatpush1.msra.mxu0 %v917
      %944 = vmatprep.subr.mxu0 0.0
      %945 = vmatpush1.msra.mxu0 %v918
      %946 = vmatprep.subr.mxu0 0.0
      %947 = vmatpush1.msra.mxu0 %v919
      %948 = vmatprep.subr.mxu0 0.0
      %949 = vmatpush1.msra.mxu0 %v920
      %950 = vmatprep.subr.mxu0 0.0
      %951 = vmatpush1.msra.mxu0 %v921
      %952 = vmatprep.subr.mxu0 0.0
      %953 = vmatpush1.msra.mxu0 %v922
      %954 = vmatprep.subr.mxu0 0.0
      %955 = vmatpush1.msra.mxu0 %v923
      %956 = vmatprep.subr.mxu0 0.0
      %957 = vmatpush1.msra.mxu0 %v924
      %958 = vmatprep.subr.mxu0 0.0
      %959 = vmatpush1.msra.mxu0 0.0
      %960 = vmatprep.subr.mxu0 0.0
      %961 = vmatpush1.msra.mxu0 0.0
      %962 = vmatprep.subr.mxu0 0.0
      %963 = vmatpush1.msra.mxu0 0.0
      %964 = vmatprep.subr.mxu0 0.0
      %965 = vmatpush1.msra.mxu0 0.0
      %966 = vmatprep.subr.mxu0 0.0
      %967 = vmatpush1.msra.mxu0 0.0
      %968 = vmatprep.subr.mxu0 0.0
      %969 = vmatpush1.msra.mxu0 0.0
      %970 = vmatprep.subr.mxu0 0.0
      %971 = vmatpush1.msra.mxu0 0.0
      %972 = vmatprep.subr.mxu0 0.0
      %973 = vmatpush1.msra.mxu0 0.0
      %974 = vmatprep.subr.mxu0 0.0
      %975 = vmatpush1.msra.mxu0 0.0
      %976 = vmatprep.subr.mxu0 0.0
      %977 = vmatpush1.msra.mxu0 0.0
      %978 = vmatprep.subr.mxu0 0.0
      %979 = vmatpush1.msra.mxu0 0.0
      %980 = vmatprep.subr.mxu0 0.0
      %981 = vmatpush1.msra.mxu0 0.0
      %982 = vmatprep.subr.mxu0 0.0
      %983 = vmatpush1.msra.mxu0 0.0
      %984 = vmatprep.subr.mxu0 0.0
      %985 = vmatpush1.msra.mxu0 0.0
      %986 = vmatprep.subr.mxu0 0.0
      %987 = vmatpush1.msra.mxu0 0.0
      %988 = vmatprep.subr.mxu0 0.0
      %989 = vmatpush1.msra.mxu0 0.0
      %990 = vmatprep.subr.mxu0 0.0
      %991 = vmatpush1.msra.mxu0 0.0
      %992 = vmatprep.subr.mxu0 0.0
      %993 = vmatpush1.msra.mxu0 0.0
      %994 = vmatprep.subr.mxu0 0.0
      %995 = vmatpush1.msra.mxu0 0.0
      %996 = vmatprep.subr.mxu0 0.0
      %997 = vmatpush1.msra.mxu0 0.0
      %998 = vmatprep.subr.mxu0 0.0
      %999 = vmatpush1.msra.mxu0 0.0
      %1000 = vmatprep.subr.mxu0 0.0
      %1001 = vmatpush1.msra.mxu0 0.0
      %1002 = vmatprep.subr.mxu0 0.0
      %1003 = vmatpush1.msra.mxu0 0.0
      %1004 = vmatprep.subr.mxu0 0.0
      %1005 = vmatpush1.msra.mxu0 0.0
      %1006 = vmatprep.mubr.f32.mxu0 0.0
      %1007 = vmatmul.mubr.f32.gmra.mrb[0].mxu0 %v931
      %v1008 = vpop.f32.mrb[0].mxu0
      %v1009 = vadd.f32 %v929, %v1008
      %v1010 = vpop.f32.mrb[0].mxu0
      %1011 = vmatprep.mubr.f32.mxu0 0.0
      %1012 = vmatmul.mubr.f32.gmra.mrb[0].mxu0 %v934
      %v1013 = vpop.f32.mrb[0].mxu0
      %v1014 = vadd.f32 %v929, %v1013
      %v1015 = vpop.f32.mrb[0].mxu0
      %1016 = vmatprep.mubr.f32.mxu0 0.0
      %1017 = vmatmul.mubr.f32.gmra.mrb[0].mxu0 %v937
      %v1018 = vpop.f32.mrb[0].mxu0
      %v1019 = vadd.f32 %v929, %v1018
      %v1020 = vpop.f32.mrb[0].mxu0
      %1021 = vmatprep.mubr.f32.mxu0 0.0
      %1022 = vmatmul.mubr.f32.gmra.mrb[0].mxu0 %v940
      %v1023 = vpop.f32.mrb[0].mxu0
      %v1024 = vadd.f32 %v929, %v1023
      %v1025 = vpop.f32.mrb[0].mxu0
      %1026 = vdwg.mxu0
      %v1027 = vmax.f32 %v1009, 0.0
      %v1028 = vmax.f32 %v1014, 0.0
      %v1029 = vmax.f32 %v1019, 0.0
      %v1030 = vmax.f32 %v1024, 0.0
      %v1031 = vld [vmem:[%s2 + $0x200] sm:$0xff]
      %v1032 = vld [vmem:[%s2 + $0x208] sm:$0xff]
      %v1033 = vld [vmem:[%s2 + $0x210] sm:$0xff]
      %v1034 = vld [vmem:[%s2 + $0x218] sm:$0xff]
      %v1035 = vld [vmem:[%s2 + $0x220] sm:$0xff]
      %v1036 = vld [vmem:[%s2 + $0x228] sm:$0xff]
      %v1037 = vld [vmem:[%s2 + $0x230] sm:$0xff]
      %v1038 = vld [vmem:[%s2 + $0x238] sm:$0xff]
      %v1040 = vsel %vm253, %v1027, 0
      %v1043 = vsel %vm253, %v1028, 0
      %v1046 = vsel %vm253, %v1029, 0
      %v1049 = vsel %vm253, %v1030, 0
      %1051 = vmatprep.subr.mxu0 0.0
      %1052 = vmatpush1.msra.mxu0 %v1031
      %1053 = vmatprep.subr.mxu0 0.0
      %1054 = vmatpush1.msra.mxu0 %v1032
      %1055 = vmatprep.subr.mxu0 0.0
      %1056 = vmatpush1.msra.mxu0 %v1033
      %1057 = vmatprep.subr.mxu0 0.0
      %1058 = vmatpush1.msra.mxu0 %v1034
      %1059 = vmatprep.subr.mxu0 0.0
      %1060 = vmatpush1.msra.mxu0 %v1035
      %1061 = vmatprep.subr.mxu0 0.0
      %1062 = vmatpush1.msra.mxu0 %v1036
      %1063 = vmatprep.subr.mxu0 0.0
      %1064 = vmatpush1.msra.mxu0 %v1037
      %1065 = vmatprep.subr.mxu0 0.0
      %1066 = vmatpush1.msra.mxu0 %v1038
      %1067 = vmatprep.subr.mxu0 0.0
      %1068 = vmatpush1.msra.mxu0 0.0
      %1069 = vmatprep.subr.mxu0 0.0
      %1070 = vmatpush1.msra.mxu0 0.0
      %1071 = vmatprep.subr.mxu0 0.0
      %1072 = vmatpush1.msra.mxu0 0.0
      %1073 = vmatprep.subr.mxu0 0.0
      %1074 = vmatpush1.msra.mxu0 0.0
      %1075 = vmatprep.subr.mxu0 0.0
      %1076 = vmatpush1.msra.mxu0 0.0
      %1077 = vmatprep.subr.mxu0 0.0
      %1078 = vmatpush1.msra.mxu0 0.0
      %1079 = vmatprep.subr.mxu0 0.0
      %1080 = vmatpush1.msra.mxu0 0.0
      %1081 = vmatprep.subr.mxu0 0.0
      %1082 = vmatpush1.msra.mxu0 0.0
      %1083 = vmatprep.subr.mxu0 0.0
      %1084 = vmatpush1.msra.mxu0 0.0
      %1085 = vmatprep.subr.mxu0 0.0
      %1086 = vmatpush1.msra.mxu0 0.0
      %1087 = vmatprep.subr.mxu0 0.0
      %1088 = vmatpush1.msra.mxu0 0.0
      %1089 = vmatprep.subr.mxu0 0.0
      %1090 = vmatpush1.msra.mxu0 0.0
      %1091 = vmatprep.subr.mxu0 0.0
      %1092 = vmatpush1.msra.mxu0 0.0
      %1093 = vmatprep.subr.mxu0 0.0
      %1094 = vmatpush1.msra.mxu0 0.0
      %1095 = vmatprep.subr.mxu0 0.0
      %1096 = vmatpush1.msra.mxu0 0.0
      %1097 = vmatprep.subr.mxu0 0.0
      %1098 = vmatpush1.msra.mxu0 0.0
      %1099 = vmatprep.subr.mxu0 0.0
      %1100 = vmatpush1.msra.mxu0 0.0
      %1101 = vmatprep.subr.mxu0 0.0
      %1102 = vmatpush1.msra.mxu0 0.0
      %1103 = vmatprep.subr.mxu0 0.0
      %1104 = vmatpush1.msra.mxu0 0.0
      %1105 = vmatprep.subr.mxu0 0.0
      %1106 = vmatpush1.msra.mxu0 0.0
      %1107 = vmatprep.subr.mxu0 0.0
      %1108 = vmatpush1.msra.mxu0 0.0
      %1109 = vmatprep.subr.mxu0 0.0
      %1110 = vmatpush1.msra.mxu0 0.0
      %1111 = vmatprep.subr.mxu0 0.0
      %1112 = vmatpush1.msra.mxu0 0.0
      %1113 = vmatprep.subr.mxu0 0.0
      %1114 = vmatpush1.msra.mxu0 0.0
      %1115 = vmatprep.mubr.f32.mxu0 0.0
      %1116 = vmatmul.mubr.f32.gmra.mrb[0].mxu0 %v1040
      %v1117 = vpop.f32.mrb[0].mxu0
      %v1118 = vadd.f32 0.0, %v1117
      %v1119 = vpop.f32.mrb[0].mxu0
      %1120 = vmatprep.mubr.f32.mxu0 0.0
      %1121 = vmatmul.mubr.f32.gmra.mrb[0].mxu0 %v1043
      %v1122 = vpop.f32.mrb[0].mxu0
      %v1123 = vadd.f32 0.0, %v1122
      %v1124 = vpop.f32.mrb[0].mxu0
      %1125 = vmatprep.mubr.f32.mxu0 0.0
      %1126 = vmatmul.mubr.f32.gmra.mrb[0].mxu0 %v1046
      %v1127 = vpop.f32.mrb[0].mxu0
      %v1128 = vadd.f32 0.0, %v1127
      %v1129 = vpop.f32.mrb[0].mxu0
      %1130 = vmatprep.mubr.f32.mxu0 0.0
      %1131 = vmatmul.mubr.f32.gmra.mrb[0].mxu0 %v1049
      %v1132 = vpop.f32.mrb[0].mxu0
      %v1133 = vadd.f32 0.0, %v1132
      %v1134 = vpop.f32.mrb[0].mxu0
      %1135 = vdwg.mxu0
      %vm1136 = vcmp.ge.s32.totalorder %v220, 1
      %vm1137 = vcmp.lt.s32.totalorder %v220, 5
      %vm1138 = vmand %vm1136, %vm1137
      %v1139 = vsel %vm1138, %v191, 0.0
      %v1140 = vsel %vm1138, %v192, 0.0
      %v1141 = vsel %vm1138, %v193, 0.0
      %v1142 = vsel %vm1138, %v194, 0.0
      %v1143 = vtanh.pop %v1118
      %v1144 = vtanh.pop %v1123
      %v1145 = vtanh.pop %v1128
      %v1146 = vtanh.pop %v1133
      %v1147 = vld [vmem:[%s2 + $0x2c6] sm:$0x1]
      %v1148 = vlaneseq
      %v1149 = vshrl.u32 %v1148, 7
      %v1150 = vsub.s32 0, %v1149
      %v1151 = vrot.slane %v1147, %v1150
      %v1152 = vadd.f32 %v1118, %v1151
      %v1153 = vadd.f32 %v1123, %v1151
      %v1154 = vadd.f32 %v1128, %v1151
      %v1155 = vadd.f32 %v1133, %v1151
      %v1156 = vsel %vm1138, %v1143, %v1152
      %v1157 = vsel %vm1138, %v1144, %v1153
      %v1158 = vsel %vm1138, %v1145, %v1154
      %v1159 = vsel %vm1138, %v1146, %v1155
      %v1160 = vadd.f32 %v1156, %v1139
      %v1161 = vadd.f32 %v1157, %v1140
      %v1162 = vadd.f32 %v1158, %v1141
      %v1163 = vadd.f32 %v1159, %v1142
      %1168 = vrot.lane.b32.xlu0 %v1160, 64
      %v1169 = vpop.permute.xlu0 %1168
      %1170 = vrot.lane.b32.xlu0 %v1161, 64
      %v1171 = vpop.permute.xlu0 %1170
      %1172 = vrot.lane.b32.xlu0 %v1162, 64
      %v1173 = vpop.permute.xlu0 %1172
      %1174 = vrot.lane.b32.xlu0 %v1163, 64
      %v1175 = vpop.permute.xlu0 %1174
      %v1180 = vsel %vm253, %v899, %v1169
      %v1181 = vsel %vm253, %v904, %v1171
      %v1182 = vsel %vm253, %v909, %v1173
      %v1183 = vsel %vm253, %v914, %v1175
      %1184 = vst [vmem:[%s190] sm:$0xff] %v1180
      %1185 = vst [vmem:[%s190 + $0x8] sm:$0xff] %v1181
      %1186 = vst [vmem:[%s190 + $0x10] sm:$0xff] %v1182
      %1187 = vst [vmem:[%s190 + $0x18] sm:$0xff] %v1183
      %v1188 = vld [vmem:[%s2] sm:$0xff]
      %v1189 = vld [vmem:[%s2 + $0x8] sm:$0xff]
      %v1190 = vld [vmem:[%s2 + $0x10] sm:$0xff]
      %v1191 = vld [vmem:[%s2 + $0x18] sm:$0xff]
      %v1192 = vld [vmem:[%s2 + $0x20] sm:$0xff]
      %v1193 = vld [vmem:[%s2 + $0x28] sm:$0xff]
      %v1194 = vld [vmem:[%s2 + $0x30] sm:$0xff]
      %v1195 = vld [vmem:[%s2 + $0x38] sm:$0xff]
      %1196 = vmatprep.subr.mxu0 0.0
      %1197 = vmatpush1.msra.mxu0 %v1188
      %1198 = vmatprep.subr.mxu0 0.0
      %1199 = vmatpush1.msra.mxu0 %v1189
      %1200 = vmatprep.subr.mxu0 0.0
      %1201 = vmatpush1.msra.mxu0 %v1190
      %1202 = vmatprep.subr.mxu0 0.0
      %1203 = vmatpush1.msra.mxu0 %v1191
      %1204 = vmatprep.subr.mxu0 0.0
      %1205 = vmatpush1.msra.mxu0 %v1192
      %1206 = vmatprep.subr.mxu0 0.0
      %1207 = vmatpush1.msra.mxu0 %v1193
      %1208 = vmatprep.subr.mxu0 0.0
      %1209 = vmatpush1.msra.mxu0 %v1194
      %1210 = vmatprep.subr.mxu0 0.0
      %1211 = vmatpush1.msra.mxu0 %v1195
      %1212 = vmatprep.subr.mxu0 0.0
      %1213 = vmatpush1.msra.mxu0 0.0
      %1214 = vmatprep.subr.mxu0 0.0
      %1215 = vmatpush1.msra.mxu0 0.0
      %1216 = vmatprep.subr.mxu0 0.0
      %1217 = vmatpush1.msra.mxu0 0.0
      %1218 = vmatprep.subr.mxu0 0.0
      %1219 = vmatpush1.msra.mxu0 0.0
      %1220 = vmatprep.subr.mxu0 0.0
      %1221 = vmatpush1.msra.mxu0 0.0
      %1222 = vmatprep.subr.mxu0 0.0
      %1223 = vmatpush1.msra.mxu0 0.0
      %1224 = vmatprep.subr.mxu0 0.0
      %1225 = vmatpush1.msra.mxu0 0.0
      %1226 = vmatprep.subr.mxu0 0.0
      %1227 = vmatpush1.msra.mxu0 0.0
      %1228 = vmatprep.subr.mxu0 0.0
      %1229 = vmatpush1.msra.mxu0 0.0
      %1230 = vmatprep.subr.mxu0 0.0
      %1231 = vmatpush1.msra.mxu0 0.0
      %1232 = vmatprep.subr.mxu0 0.0
      %1233 = vmatpush1.msra.mxu0 0.0
      %1234 = vmatprep.subr.mxu0 0.0
      %1235 = vmatpush1.msra.mxu0 0.0
      %1236 = vmatprep.subr.mxu0 0.0
      %1237 = vmatpush1.msra.mxu0 0.0
      %1238 = vmatprep.subr.mxu0 0.0
      %1239 = vmatpush1.msra.mxu0 0.0
      %1240 = vmatprep.subr.mxu0 0.0
      %1241 = vmatpush1.msra.mxu0 0.0
      %1242 = vmatprep.subr.mxu0 0.0
      %1243 = vmatpush1.msra.mxu0 0.0
      %1244 = vmatprep.subr.mxu0 0.0
      %1245 = vmatpush1.msra.mxu0 0.0
      %1246 = vmatprep.subr.mxu0 0.0
      %1247 = vmatpush1.msra.mxu0 0.0
      %1248 = vmatprep.subr.mxu0 0.0
      %1249 = vmatpush1.msra.mxu0 0.0
      %1250 = vmatprep.subr.mxu0 0.0
      %1251 = vmatpush1.msra.mxu0 0.0
      %1252 = vmatprep.subr.mxu0 0.0
      %1253 = vmatpush1.msra.mxu0 0.0
      %1254 = vmatprep.subr.mxu0 0.0
      %1255 = vmatpush1.msra.mxu0 0.0
      %1256 = vmatprep.subr.mxu0 0.0
      %1257 = vmatpush1.msra.mxu0 0.0
      %1258 = vmatprep.subr.mxu0 0.0
      %1259 = vmatpush1.msra.mxu0 0.0
      %1260 = vmatprep.mubr.f32.mxu0 0.0
      %1261 = vmatmul.mubr.f32.gmra.mrb[0].mxu0 %v931
      %v1262 = vpop.f32.mrb[0].mxu0
      %v1263 = vadd.f32 0.0, %v1262
      %v1264 = vpop.f32.mrb[0].mxu0
      %1265 = vmatprep.mubr.f32.mxu0 0.0
      %1266 = vmatmul.mubr.f32.gmra.mrb[0].mxu0 %v934
      %v1267 = vpop.f32.mrb[0].mxu0
      %v1268 = vadd.f32 0.0, %v1267
      %v1269 = vpop.f32.mrb[0].mxu0
      %1270 = vmatprep.mubr.f32.mxu0 0.0
      %1271 = vmatmul.mubr.f32.gmra.mrb[0].mxu0 %v937
      %v1272 = vpop.f32.mrb[0].mxu0
      %v1273 = vadd.f32 0.0, %v1272
      %v1274 = vpop.f32.mrb[0].mxu0
      %1275 = vmatprep.mubr.f32.mxu0 0.0
      %1276 = vmatmul.mubr.f32.gmra.mrb[0].mxu0 %v940
      %v1277 = vpop.f32.mrb[0].mxu0
      %v1278 = vadd.f32 0.0, %v1277
      %v1279 = vpop.f32.mrb[0].mxu0
      %1280 = vdwg.mxu0
      %1285 = vrot.lane.b32.xlu0 %v1263, 64
      %v1286 = vpop.permute.xlu0 %1285
      %1287 = vrot.lane.b32.xlu0 %v1268, 64
      %v1288 = vpop.permute.xlu0 %1287
      %1289 = vrot.lane.b32.xlu0 %v1273, 64
      %v1290 = vpop.permute.xlu0 %1289
      %1291 = vrot.lane.b32.xlu0 %v1278, 64
      %v1292 = vpop.permute.xlu0 %1291
      %v1297 = vld [vmem:[%s185] sm:$0xff]
      %v1298 = vld [vmem:[%s185 + $0x8] sm:$0xff]
      %v1299 = vld [vmem:[%s185 + $0x10] sm:$0xff]
      %v1300 = vld [vmem:[%s185 + $0x18] sm:$0xff]
      %v1301 = vld [vmem:[%s185 + $0x20] sm:$0xff]
      %v1302 = vld [vmem:[%s185 + $0x28] sm:$0xff]
      %v1303 = vld [vmem:[%s185 + $0x30] sm:$0xff]
      %v1304 = vld [vmem:[%s185 + $0x38] sm:$0xff]
      %1305 = vset.pattern.permute.xlu0 0
      %1306 = vperm.xlu0 %1305, %v1297
      %v1307 = vpop.permute.xlu0 %1306
      %1308 = vset.pattern.permute.xlu0 0
      %1309 = vperm.xlu0 %1308, %v1298
      %v1310 = vpop.permute.xlu0 %1309
      %1311 = vset.pattern.permute.xlu0 0
      %1312 = vperm.xlu0 %1311, %v1299
      %v1313 = vpop.permute.xlu0 %1312
      %1314 = vset.pattern.permute.xlu0 0
      %1315 = vperm.xlu0 %1314, %v1300
      %v1316 = vpop.permute.xlu0 %1315
      %1317 = vset.pattern.permute.xlu0 0
      %1318 = vperm.xlu0 %1317, %v1301
      %v1319 = vpop.permute.xlu0 %1318
      %1320 = vset.pattern.permute.xlu0 0
      %1321 = vperm.xlu0 %1320, %v1302
      %v1322 = vpop.permute.xlu0 %1321
      %1323 = vset.pattern.permute.xlu0 0
      %1324 = vperm.xlu0 %1323, %v1303
      %v1325 = vpop.permute.xlu0 %1324
      %1326 = vset.pattern.permute.xlu0 0
      %1327 = vperm.xlu0 %1326, %v1304
      %v1328 = vpop.permute.xlu0 %1327
      %vm1329 = vcmp.eq.s32.totalorder %v1307, %v220
      %vm1330 = vcmp.eq.s32.totalorder %v1310, %v220
      %vm1331 = vcmp.eq.s32.totalorder %v1313, %v220
      %vm1332 = vcmp.eq.s32.totalorder %v1316, %v220
      %vm1333 = vcmp.eq.s32.totalorder %v1319, %v220
      %vm1334 = vcmp.eq.s32.totalorder %v1322, %v220
      %vm1335 = vcmp.eq.s32.totalorder %v1325, %v220
      %vm1336 = vcmp.eq.s32.totalorder %v1328, %v220
      %1337 = vset.pattern.permute.xlu0 1
      %1338 = vperm.xlu0 %1337, %v1297
      %v1339 = vpop.permute.xlu0 %1338
      %1340 = vset.pattern.permute.xlu0 1
      %1341 = vperm.xlu0 %1340, %v1298
      %v1342 = vpop.permute.xlu0 %1341
      %1343 = vset.pattern.permute.xlu0 1
      %1344 = vperm.xlu0 %1343, %v1299
      %v1345 = vpop.permute.xlu0 %1344
      %1346 = vset.pattern.permute.xlu0 1
      %1347 = vperm.xlu0 %1346, %v1300
      %v1348 = vpop.permute.xlu0 %1347
      %1349 = vset.pattern.permute.xlu0 1
      %1350 = vperm.xlu0 %1349, %v1301
      %v1351 = vpop.permute.xlu0 %1350
      %1352 = vset.pattern.permute.xlu0 1
      %1353 = vperm.xlu0 %1352, %v1302
      %v1354 = vpop.permute.xlu0 %1353
      %1355 = vset.pattern.permute.xlu0 1
      %1356 = vperm.xlu0 %1355, %v1303
      %v1357 = vpop.permute.xlu0 %1356
      %1358 = vset.pattern.permute.xlu0 1
      %1359 = vperm.xlu0 %1358, %v1304
      %v1360 = vpop.permute.xlu0 %1359
      %vm1361 = vcmp.eq.s32.totalorder %v1339, %v220
      %vm1362 = vcmp.eq.s32.totalorder %v1342, %v220
      %vm1363 = vcmp.eq.s32.totalorder %v1345, %v220
      %vm1364 = vcmp.eq.s32.totalorder %v1348, %v220
      %vm1365 = vcmp.eq.s32.totalorder %v1351, %v220
      %vm1366 = vcmp.eq.s32.totalorder %v1354, %v220
      %vm1367 = vcmp.eq.s32.totalorder %v1357, %v220
      %vm1368 = vcmp.eq.s32.totalorder %v1360, %v220
      %vm1369 = vmor %vm1329, %vm1361
      %vm1370 = vmor %vm1330, %vm1362
      %vm1371 = vmor %vm1331, %vm1363
      %vm1372 = vmor %vm1332, %vm1364
      %vm1373 = vmor %vm1333, %vm1365
      %vm1374 = vmor %vm1334, %vm1366
      %vm1375 = vmor %vm1335, %vm1367
      %vm1376 = vmor %vm1336, %vm1368
      %v1377 = vsel %vm1369, 1, 0
      %v1378 = vsel %vm1370, 1, 0
      %v1379 = vsel %vm1371, 1, 0
      %v1380 = vsel %vm1372, 1, 0
      %v1381 = vsel %vm1373, 1, 0
      %v1382 = vsel %vm1374, 1, 0
      %v1383 = vsel %vm1375, 1, 0
      %v1384 = vsel %vm1376, 1, 0
      %v1385 = vcvt.s32.f32 %v1377
      %v1386 = vcvt.s32.f32 %v1378
      %v1387 = vcvt.s32.f32 %v1379
      %v1388 = vcvt.s32.f32 %v1380
      %v1389 = vcvt.s32.f32 %v1381
      %v1390 = vcvt.s32.f32 %v1382
      %v1391 = vcvt.s32.f32 %v1383
      %v1392 = vcvt.s32.f32 %v1384
      %v1393 = vld [vmem:[%s2 + $0x2c7] sm:$0x1]
      %v1394 = vlaneseq
      %v1395 = vshrl.u32 %v1394, 7
      %v1396 = vsub.s32 0, %v1395
      %v1397 = vrot.slane %v1393, %v1396
      %v1399 = vsel %vm253, %v1385, 0
      %v1402 = vsel %vm253, %v1386, 0
      %v1405 = vsel %vm253, %v1387, 0
      %v1408 = vsel %vm253, %v1388, 0
      %v1411 = vsel %vm253, %v1389, 0
      %v1414 = vsel %vm253, %v1390, 0
      %v1417 = vsel %vm253, %v1391, 0
      %v1420 = vsel %vm253, %v1392, 0
      %1422 = vmatprep.subr.mxu0 0.0
      %1423 = vmatpush1.msra.mxu0 %v1263
      %1424 = vmatprep.subr.mxu0 0.0
      %1425 = vmatpush1.msra.mxu0 %v1268
      %1426 = vmatprep.subr.mxu0 0.0
      %1427 = vmatpush1.msra.mxu0 %v1273
      %1428 = vmatprep.subr.mxu0 0.0
      %1429 = vmatpush1.msra.mxu0 %v1278
      %1430 = vmatprep.subr.mxu0 0.0
      %1431 = vmatpush1.msra.mxu0 %v1286
      %1432 = vmatprep.subr.mxu0 0.0
      %1433 = vmatpush1.msra.mxu0 %v1288
      %1434 = vmatprep.subr.mxu0 0.0
      %1435 = vmatpush1.msra.mxu0 %v1290
      %1436 = vmatprep.subr.mxu0 0.0
      %1437 = vmatpush1.msra.mxu0 %v1292
      %1438 = vmatprep.subr.mxu0 0.0
      %1439 = vmatpush1.msra.mxu0 0.0
      %1440 = vmatprep.subr.mxu0 0.0
      %1441 = vmatpush1.msra.mxu0 0.0
      %1442 = vmatprep.subr.mxu0 0.0
      %1443 = vmatpush1.msra.mxu0 0.0
      %1444 = vmatprep.subr.mxu0 0.0
      %1445 = vmatpush1.msra.mxu0 0.0
      %1446 = vmatprep.subr.mxu0 0.0
      %1447 = vmatpush1.msra.mxu0 0.0
      %1448 = vmatprep.subr.mxu0 0.0
      %1449 = vmatpush1.msra.mxu0 0.0
      %1450 = vmatprep.subr.mxu0 0.0
      %1451 = vmatpush1.msra.mxu0 0.0
      %1452 = vmatprep.subr.mxu0 0.0
      %1453 = vmatpush1.msra.mxu0 0.0
      %1454 = vmatprep.subr.mxu0 0.0
      %1455 = vmatpush1.msra.mxu0 0.0
      %1456 = vmatprep.subr.mxu0 0.0
      %1457 = vmatpush1.msra.mxu0 0.0
      %1458 = vmatprep.subr.mxu0 0.0
      %1459 = vmatpush1.msra.mxu0 0.0
      %1460 = vmatprep.subr.mxu0 0.0
      %1461 = vmatpush1.msra.mxu0 0.0
      %1462 = vmatprep.subr.mxu0 0.0
      %1463 = vmatpush1.msra.mxu0 0.0
      %1464 = vmatprep.subr.mxu0 0.0
      %1465 = vmatpush1.msra.mxu0 0.0
      %1466 = vmatprep.subr.mxu0 0.0
      %1467 = vmatpush1.msra.mxu0 0.0
      %1468 = vmatprep.subr.mxu0 0.0
      %1469 = vmatpush1.msra.mxu0 0.0
      %1470 = vmatprep.subr.mxu0 0.0
      %1471 = vmatpush1.msra.mxu0 0.0
      %1472 = vmatprep.subr.mxu0 0.0
      %1473 = vmatpush1.msra.mxu0 0.0
      %1474 = vmatprep.subr.mxu0 0.0
      %1475 = vmatpush1.msra.mxu0 0.0
      %1476 = vmatprep.subr.mxu0 0.0
      %1477 = vmatpush1.msra.mxu0 0.0
      %1478 = vmatprep.subr.mxu0 0.0
      %1479 = vmatpush1.msra.mxu0 0.0
      %1480 = vmatprep.subr.mxu0 0.0
      %1481 = vmatpush1.msra.mxu0 0.0
      %1482 = vmatprep.subr.mxu0 0.0
      %1483 = vmatpush1.msra.mxu0 0.0
      %1484 = vmatprep.subr.mxu0 0.0
      %1485 = vmatpush1.msra.mxu0 0.0
      %1486 = vmatprep.mubr.f32.mxu0 0.0
      %1487 = vmatmul.mubr.f32.gmra.mrb[0].mxu0 %v1399
      %v1488 = vpop.f32.mrb[0].mxu0
      %v1489 = vadd.f32 %v1397, %v1488
      %v1490 = vpop.f32.mrb[0].mxu0
      %1491 = vmatprep.mubr.f32.mxu0 0.0
      %1492 = vmatmul.mubr.f32.gmra.mrb[0].mxu0 %v1402
      %v1493 = vpop.f32.mrb[0].mxu0
      %v1494 = vadd.f32 %v1397, %v1493
      %v1495 = vpop.f32.mrb[0].mxu0
      %1496 = vmatprep.mubr.f32.mxu0 0.0
      %1497 = vmatmul.mubr.f32.gmra.mrb[0].mxu0 %v1405
      %v1498 = vpop.f32.mrb[0].mxu0
      %v1499 = vadd.f32 %v1397, %v1498
      %v1500 = vpop.f32.mrb[0].mxu0
      %1501 = vmatprep.mubr.f32.mxu0 0.0
      %1502 = vmatmul.mubr.f32.gmra.mrb[0].mxu0 %v1408
      %v1503 = vpop.f32.mrb[0].mxu0
      %v1504 = vadd.f32 %v1397, %v1503
      %v1505 = vpop.f32.mrb[0].mxu0
      %1506 = vmatprep.mubr.f32.mxu0 0.0
      %1507 = vmatmul.mubr.f32.gmra.mrb[0].mxu0 %v1411
      %v1508 = vpop.f32.mrb[0].mxu0
      %v1509 = vadd.f32 %v1397, %v1508
      %v1510 = vpop.f32.mrb[0].mxu0
      %1511 = vmatprep.mubr.f32.mxu0 0.0
      %1512 = vmatmul.mubr.f32.gmra.mrb[0].mxu0 %v1414
      %v1513 = vpop.f32.mrb[0].mxu0
      %v1514 = vadd.f32 %v1397, %v1513
      %v1515 = vpop.f32.mrb[0].mxu0
      %1516 = vmatprep.mubr.f32.mxu0 0.0
      %1517 = vmatmul.mubr.f32.gmra.mrb[0].mxu0 %v1417
      %v1518 = vpop.f32.mrb[0].mxu0
      %v1519 = vadd.f32 %v1397, %v1518
      %v1520 = vpop.f32.mrb[0].mxu0
      %1521 = vmatprep.mubr.f32.mxu0 0.0
      %1522 = vmatmul.mubr.f32.gmra.mrb[0].mxu0 %v1420
      %v1523 = vpop.f32.mrb[0].mxu0
      %v1524 = vadd.f32 %v1397, %v1523
      %v1525 = vpop.f32.mrb[0].mxu0
      %1526 = vdwg.mxu0
      %v1527 = vmax.f32 %v1489, 0.0
      %v1528 = vmax.f32 %v1494, 0.0
      %v1529 = vmax.f32 %v1499, 0.0
      %v1530 = vmax.f32 %v1504, 0.0
      %v1531 = vmax.f32 %v1509, 0.0
      %v1532 = vmax.f32 %v1514, 0.0
      %v1533 = vmax.f32 %v1519, 0.0
      %v1534 = vmax.f32 %v1524, 0.0
      %v1535 = vld [vmem:[%s2 + $0x240] sm:$0xff]
      %v1536 = vld [vmem:[%s2 + $0x248] sm:$0xff]
      %v1537 = vld [vmem:[%s2 + $0x250] sm:$0xff]
      %v1538 = vld [vmem:[%s2 + $0x258] sm:$0xff]
      %v1539 = vld [vmem:[%s2 + $0x260] sm:$0xff]
      %v1540 = vld [vmem:[%s2 + $0x268] sm:$0xff]
      %v1541 = vld [vmem:[%s2 + $0x270] sm:$0xff]
      %v1542 = vld [vmem:[%s2 + $0x278] sm:$0xff]
      %v1543 = vld [vmem:[%s2 + $0x2c8] sm:$0x1]
      %v1544 = vlaneseq
      %v1545 = vshrl.u32 %v1544, 7
      %v1546 = vsub.s32 0, %v1545
      %v1547 = vrot.slane %v1543, %v1546
      %v1549 = vsel %vm253, %v1527, 0
      %v1552 = vsel %vm253, %v1528, 0
      %v1555 = vsel %vm253, %v1529, 0
      %v1558 = vsel %vm253, %v1530, 0
      %v1561 = vsel %vm253, %v1531, 0
      %v1564 = vsel %vm253, %v1532, 0
      %v1567 = vsel %vm253, %v1533, 0
      %v1570 = vsel %vm253, %v1534, 0
      %1572 = vmatprep.subr.mxu0 0.0
      %1573 = vmatpush1.msra.mxu0 %v1535
      %1574 = vmatprep.subr.mxu0 0.0
      %1575 = vmatpush1.msra.mxu0 %v1536
      %1576 = vmatprep.subr.mxu0 0.0
      %1577 = vmatpush1.msra.mxu0 %v1537
      %1578 = vmatprep.subr.mxu0 0.0
      %1579 = vmatpush1.msra.mxu0 %v1538
      %1580 = vmatprep.subr.mxu0 0.0
      %1581 = vmatpush1.msra.mxu0 %v1539
      %1582 = vmatprep.subr.mxu0 0.0
      %1583 = vmatpush1.msra.mxu0 %v1540
      %1584 = vmatprep.subr.mxu0 0.0
      %1585 = vmatpush1.msra.mxu0 %v1541
      %1586 = vmatprep.subr.mxu0 0.0
      %1587 = vmatpush1.msra.mxu0 %v1542
      %1588 = vmatprep.subr.mxu0 0.0
      %1589 = vmatpush1.msra.mxu0 0.0
      %1590 = vmatprep.subr.mxu0 0.0
      %1591 = vmatpush1.msra.mxu0 0.0
      %1592 = vmatprep.subr.mxu0 0.0
      %1593 = vmatpush1.msra.mxu0 0.0
      %1594 = vmatprep.subr.mxu0 0.0
      %1595 = vmatpush1.msra.mxu0 0.0
      %1596 = vmatprep.subr.mxu0 0.0
      %1597 = vmatpush1.msra.mxu0 0.0
      %1598 = vmatprep.subr.mxu0 0.0
      %1599 = vmatpush1.msra.mxu0 0.0
      %1600 = vmatprep.subr.mxu0 0.0
      %1601 = vmatpush1.msra.mxu0 0.0
      %1602 = vmatprep.subr.mxu0 0.0
      %1603 = vmatpush1.msra.mxu0 0.0
      %1604 = vmatprep.subr.mxu0 0.0
      %1605 = vmatpush1.msra.mxu0 0.0
      %1606 = vmatprep.subr.mxu0 0.0
      %1607 = vmatpush1.msra.mxu0 0.0
      %1608 = vmatprep.subr.mxu0 0.0
      %1609 = vmatpush1.msra.mxu0 0.0
      %1610 = vmatprep.subr.mxu0 0.0
      %1611 = vmatpush1.msra.mxu0 0.0
      %1612 = vmatprep.subr.mxu0 0.0
      %1613 = vmatpush1.msra.mxu0 0.0
      %1614 = vmatprep.subr.mxu0 0.0
      %1615 = vmatpush1.msra.mxu0 0.0
      %1616 = vmatprep.subr.mxu0 0.0
      %1617 = vmatpush1.msra.mxu0 0.0
      %1618 = vmatprep.subr.mxu0 0.0
      %1619 = vmatpush1.msra.mxu0 0.0
      %1620 = vmatprep.subr.mxu0 0.0
      %1621 = vmatpush1.msra.mxu0 0.0
      %1622 = vmatprep.subr.mxu0 0.0
      %1623 = vmatpush1.msra.mxu0 0.0
      %1624 = vmatprep.subr.mxu0 0.0
      %1625 = vmatpush1.msra.mxu0 0.0
      %1626 = vmatprep.subr.mxu0 0.0
      %1627 = vmatpush1.msra.mxu0 0.0
      %1628 = vmatprep.subr.mxu0 0.0
      %1629 = vmatpush1.msra.mxu0 0.0
      %1630 = vmatprep.subr.mxu0 0.0
      %1631 = vmatpush1.msra.mxu0 0.0
      %1632 = vmatprep.subr.mxu0 0.0
      %1633 = vmatpush1.msra.mxu0 0.0
      %1634 = vmatprep.subr.mxu0 0.0
      %1635 = vmatpush1.msra.mxu0 0.0
      %1636 = vmatprep.mubr.f32.mxu0 0.0
      %1637 = vmatmul.mubr.f32.gmra.mrb[0].mxu0 %v1549
      %v1638 = vpop.f32.mrb[0].mxu0
      %v1639 = vadd.f32 %v1547, %v1638
      %v1640 = vpop.f32.mrb[0].mxu0
      %1641 = vmatprep.mubr.f32.mxu0 0.0
      %1642 = vmatmul.mubr.f32.gmra.mrb[0].mxu0 %v1552
      %v1643 = vpop.f32.mrb[0].mxu0
      %v1644 = vadd.f32 %v1547, %v1643
      %v1645 = vpop.f32.mrb[0].mxu0
      %1646 = vmatprep.mubr.f32.mxu0 0.0
      %1647 = vmatmul.mubr.f32.gmra.mrb[0].mxu0 %v1555
      %v1648 = vpop.f32.mrb[0].mxu0
      %v1649 = vadd.f32 %v1547, %v1648
      %v1650 = vpop.f32.mrb[0].mxu0
      %1651 = vmatprep.mubr.f32.mxu0 0.0
      %1652 = vmatmul.mubr.f32.gmra.mrb[0].mxu0 %v1558
      %v1653 = vpop.f32.mrb[0].mxu0
      %v1654 = vadd.f32 %v1547, %v1653
      %v1655 = vpop.f32.mrb[0].mxu0
      %1656 = vmatprep.mubr.f32.mxu0 0.0
      %1657 = vmatmul.mubr.f32.gmra.mrb[0].mxu0 %v1561
      %v1658 = vpop.f32.mrb[0].mxu0
      %v1659 = vadd.f32 %v1547, %v1658
      %v1660 = vpop.f32.mrb[0].mxu0
      %1661 = vmatprep.mubr.f32.mxu0 0.0
      %1662 = vmatmul.mubr.f32.gmra.mrb[0].mxu0 %v1564
      %v1663 = vpop.f32.mrb[0].mxu0
      %v1664 = vadd.f32 %v1547, %v1663
      %v1665 = vpop.f32.mrb[0].mxu0
      %1666 = vmatprep.mubr.f32.mxu0 0.0
      %1667 = vmatmul.mubr.f32.gmra.mrb[0].mxu0 %v1567
      %v1668 = vpop.f32.mrb[0].mxu0
      %v1669 = vadd.f32 %v1547, %v1668
      %v1670 = vpop.f32.mrb[0].mxu0
      %1671 = vmatprep.mubr.f32.mxu0 0.0
      %1672 = vmatmul.mubr.f32.gmra.mrb[0].mxu0 %v1570
      %v1673 = vpop.f32.mrb[0].mxu0
      %v1674 = vadd.f32 %v1547, %v1673
      %v1675 = vpop.f32.mrb[0].mxu0
      %1676 = vdwg.mxu0
      %v1677 = vmax.f32 %v1639, 0.0
      %v1678 = vmax.f32 %v1644, 0.0
      %v1679 = vmax.f32 %v1649, 0.0
      %v1680 = vmax.f32 %v1654, 0.0
      %v1681 = vmax.f32 %v1659, 0.0
      %v1682 = vmax.f32 %v1664, 0.0
      %v1683 = vmax.f32 %v1669, 0.0
      %v1684 = vmax.f32 %v1674, 0.0
      %v1685 = vld [vmem:[%s2 + $0x280] sm:$0xff]
      %v1686 = vld [vmem:[%s2 + $0x288] sm:$0xff]
      %v1687 = vld [vmem:[%s2 + $0x290] sm:$0xff]
      %v1688 = vld [vmem:[%s2 + $0x298] sm:$0xff]
      %v1689 = vld [vmem:[%s2 + $0x2a0] sm:$0xff]
      %v1690 = vld [vmem:[%s2 + $0x2a8] sm:$0xff]
      %v1691 = vld [vmem:[%s2 + $0x2b0] sm:$0xff]
      %v1692 = vld [vmem:[%s2 + $0x2b8] sm:$0xff]
      %v1693 = vld [vmem:[%s2 + $0x2c9] sm:$0x1]
      %v1694 = vlaneseq
      %v1695 = vshrl.u32 %v1694, 7
      %v1696 = vsub.s32 0, %v1695
      %v1697 = vrot.slane %v1693, %v1696
      %v1699 = vsel %vm253, %v1677, 0
      %v1702 = vsel %vm253, %v1678, 0
      %v1705 = vsel %vm253, %v1679, 0
      %v1708 = vsel %vm253, %v1680, 0
      %v1711 = vsel %vm253, %v1681, 0
      %v1714 = vsel %vm253, %v1682, 0
      %v1717 = vsel %vm253, %v1683, 0
      %v1720 = vsel %vm253, %v1684, 0
      %1722 = vmatprep.subr.mxu0 0.0
      %1723 = vmatpush1.msra.mxu0 %v1685
      %1724 = vmatprep.subr.mxu0 0.0
      %1725 = vmatpush1.msra.mxu0 %v1686
      %1726 = vmatprep.subr.mxu0 0.0
      %1727 = vmatpush1.msra.mxu0 %v1687
      %1728 = vmatprep.subr.mxu0 0.0
      %1729 = vmatpush1.msra.mxu0 %v1688
      %1730 = vmatprep.subr.mxu0 0.0
      %1731 = vmatpush1.msra.mxu0 %v1689
      %1732 = vmatprep.subr.mxu0 0.0
      %1733 = vmatpush1.msra.mxu0 %v1690
      %1734 = vmatprep.subr.mxu0 0.0
      %1735 = vmatpush1.msra.mxu0 %v1691
      %1736 = vmatprep.subr.mxu0 0.0
      %1737 = vmatpush1.msra.mxu0 %v1692
      %1738 = vmatprep.subr.mxu0 0.0
      %1739 = vmatpush1.msra.mxu0 0.0
      %1740 = vmatprep.subr.mxu0 0.0
      %1741 = vmatpush1.msra.mxu0 0.0
      %1742 = vmatprep.subr.mxu0 0.0
      %1743 = vmatpush1.msra.mxu0 0.0
      %1744 = vmatprep.subr.mxu0 0.0
      %1745 = vmatpush1.msra.mxu0 0.0
      %1746 = vmatprep.subr.mxu0 0.0
      %1747 = vmatpush1.msra.mxu0 0.0
      %1748 = vmatprep.subr.mxu0 0.0
      %1749 = vmatpush1.msra.mxu0 0.0
      %1750 = vmatprep.subr.mxu0 0.0
      %1751 = vmatpush1.msra.mxu0 0.0
      %1752 = vmatprep.subr.mxu0 0.0
      %1753 = vmatpush1.msra.mxu0 0.0
      %1754 = vmatprep.subr.mxu0 0.0
      %1755 = vmatpush1.msra.mxu0 0.0
      %1756 = vmatprep.subr.mxu0 0.0
      %1757 = vmatpush1.msra.mxu0 0.0
      %1758 = vmatprep.subr.mxu0 0.0
      %1759 = vmatpush1.msra.mxu0 0.0
      %1760 = vmatprep.subr.mxu0 0.0
      %1761 = vmatpush1.msra.mxu0 0.0
      %1762 = vmatprep.subr.mxu0 0.0
      %1763 = vmatpush1.msra.mxu0 0.0
      %1764 = vmatprep.subr.mxu0 0.0
      %1765 = vmatpush1.msra.mxu0 0.0
      %1766 = vmatprep.subr.mxu0 0.0
      %1767 = vmatpush1.msra.mxu0 0.0
      %1768 = vmatprep.subr.mxu0 0.0
      %1769 = vmatpush1.msra.mxu0 0.0
      %1770 = vmatprep.subr.mxu0 0.0
      %1771 = vmatpush1.msra.mxu0 0.0
      %1772 = vmatprep.subr.mxu0 0.0
      %1773 = vmatpush1.msra.mxu0 0.0
      %1774 = vmatprep.subr.mxu0 0.0
      %1775 = vmatpush1.msra.mxu0 0.0
      %1776 = vmatprep.subr.mxu0 0.0
      %1777 = vmatpush1.msra.mxu0 0.0
      %1778 = vmatprep.subr.mxu0 0.0
      %1779 = vmatpush1.msra.mxu0 0.0
      %1780 = vmatprep.subr.mxu0 0.0
      %1781 = vmatpush1.msra.mxu0 0.0
      %1782 = vmatprep.subr.mxu0 0.0
      %1783 = vmatpush1.msra.mxu0 0.0
      %1784 = vmatprep.subr.mxu0 0.0
      %1785 = vmatpush1.msra.mxu0 0.0
      %1786 = vmatprep.mubr.f32.mxu0 0.0
      %1787 = vmatmul.mubr.f32.gmra.mrb[0].mxu0 %v1699
      %v1788 = vpop.f32.mrb[0].mxu0
      %v1789 = vadd.f32 %v1697, %v1788
      %v1790 = vpop.f32.mrb[0].mxu0
      %1791 = vmatprep.mubr.f32.mxu0 0.0
      %1792 = vmatmul.mubr.f32.gmra.mrb[0].mxu0 %v1702
      %v1793 = vpop.f32.mrb[0].mxu0
      %v1794 = vadd.f32 %v1697, %v1793
      %v1795 = vpop.f32.mrb[0].mxu0
      %1796 = vmatprep.mubr.f32.mxu0 0.0
      %1797 = vmatmul.mubr.f32.gmra.mrb[0].mxu0 %v1705
      %v1798 = vpop.f32.mrb[0].mxu0
      %v1799 = vadd.f32 %v1697, %v1798
      %v1800 = vpop.f32.mrb[0].mxu0
      %1801 = vmatprep.mubr.f32.mxu0 0.0
      %1802 = vmatmul.mubr.f32.gmra.mrb[0].mxu0 %v1708
      %v1803 = vpop.f32.mrb[0].mxu0
      %v1804 = vadd.f32 %v1697, %v1803
      %v1805 = vpop.f32.mrb[0].mxu0
      %1806 = vmatprep.mubr.f32.mxu0 0.0
      %1807 = vmatmul.mubr.f32.gmra.mrb[0].mxu0 %v1711
      %v1808 = vpop.f32.mrb[0].mxu0
      %v1809 = vadd.f32 %v1697, %v1808
      %v1810 = vpop.f32.mrb[0].mxu0
      %1811 = vmatprep.mubr.f32.mxu0 0.0
      %1812 = vmatmul.mubr.f32.gmra.mrb[0].mxu0 %v1714
      %v1813 = vpop.f32.mrb[0].mxu0
      %v1814 = vadd.f32 %v1697, %v1813
      %v1815 = vpop.f32.mrb[0].mxu0
      %1816 = vmatprep.mubr.f32.mxu0 0.0
      %1817 = vmatmul.mubr.f32.gmra.mrb[0].mxu0 %v1717
      %v1818 = vpop.f32.mrb[0].mxu0
      %v1819 = vadd.f32 %v1697, %v1818
      %v1820 = vpop.f32.mrb[0].mxu0
      %1821 = vmatprep.mubr.f32.mxu0 0.0
      %1822 = vmatmul.mubr.f32.gmra.mrb[0].mxu0 %v1720
      %v1823 = vpop.f32.mrb[0].mxu0
      %v1824 = vadd.f32 %v1697, %v1823
      %v1825 = vpop.f32.mrb[0].mxu0
      %1826 = vdwg.mxu0
      %v1827 = vxor.u32 %v1789, 2147483648
      %v1828 = vxor.u32 %v1794, 2147483648
      %v1829 = vxor.u32 %v1799, 2147483648
      %v1830 = vxor.u32 %v1804, 2147483648
      %v1831 = vxor.u32 %v1809, 2147483648
      %v1832 = vxor.u32 %v1814, 2147483648
      %v1833 = vxor.u32 %v1819, 2147483648
      %v1834 = vxor.u32 %v1824, 2147483648
      %v1835 = vmul.f32 %v1827, 1.442695
      %v1836 = vpow.pop %v1835
      %v1837 = vmul.f32 %v1828, 1.442695
      %v1838 = vpow.pop %v1837
      %v1839 = vmul.f32 %v1829, 1.442695
      %v1840 = vpow.pop %v1839
      %v1841 = vmul.f32 %v1830, 1.442695
      %v1842 = vpow.pop %v1841
      %v1843 = vmul.f32 %v1831, 1.442695
      %v1844 = vpow.pop %v1843
      %v1845 = vmul.f32 %v1832, 1.442695
      %v1846 = vpow.pop %v1845
      %v1847 = vmul.f32 %v1833, 1.442695
      %v1848 = vpow.pop %v1847
      %v1849 = vmul.f32 %v1834, 1.442695
      %v1850 = vpow.pop %v1849
      %v1851 = vadd.f32 %v1836, 1.0
      %v1852 = vadd.f32 %v1838, 1.0
      %v1853 = vadd.f32 %v1840, 1.0
      %v1854 = vadd.f32 %v1842, 1.0
      %v1855 = vadd.f32 %v1844, 1.0
      %v1856 = vadd.f32 %v1846, 1.0
      %v1857 = vadd.f32 %v1848, 1.0
      %v1858 = vadd.f32 %v1850, 1.0
      %v1859 = vrcp.pop %v1851
      %v1860 = vmul.f32 1.0, %v1859
      %v1861 = vrcp.pop %v1852
      %v1862 = vmul.f32 1.0, %v1861
      %v1863 = vrcp.pop %v1853
      %v1864 = vmul.f32 1.0, %v1863
      %v1865 = vrcp.pop %v1854
      %v1866 = vmul.f32 1.0, %v1865
      %v1867 = vrcp.pop %v1855
      %v1868 = vmul.f32 1.0, %v1867
      %v1869 = vrcp.pop %v1856
      %v1870 = vmul.f32 1.0, %v1869
      %v1871 = vrcp.pop %v1857
      %v1872 = vmul.f32 1.0, %v1871
      %v1873 = vrcp.pop %v1858
      %v1874 = vmul.f32 1.0, %v1873
      %v1875 = vsel %vm253, %v1860, 0.0
      %v1876 = vsel %vm253, %v1862, 0.0
      %v1877 = vsel %vm253, %v1864, 0.0
      %v1878 = vsel %vm253, %v1866, 0.0
      %v1879 = vsel %vm253, %v1868, 0.0
      %v1880 = vsel %vm253, %v1870, 0.0
      %v1881 = vsel %vm253, %v1872, 0.0
      %v1882 = vsel %vm253, %v1874, 0.0
      %1883 = vst [vmem:[%s190 + $0x20] sm:$0xff] %v1875
      %1884 = vst [vmem:[%s190 + $0x28] sm:$0xff] %v1876
      %1885 = vst [vmem:[%s190 + $0x30] sm:$0xff] %v1877
      %1886 = vst [vmem:[%s190 + $0x38] sm:$0xff] %v1878
      %1887 = vst [vmem:[%s190 + $0x40] sm:$0xff] %v1879
      %1888 = vst [vmem:[%s190 + $0x48] sm:$0xff] %v1880
      %1889 = vst [vmem:[%s190 + $0x50] sm:$0xff] %v1881
      %1890 = vst [vmem:[%s190 + $0x58] sm:$0xff] %v1882
      %p1891 = scmp.lt.s32.totalorder %s14, 3
      %s1892 = scalar_select %p1891, %s14, 3
      %s1893 = smul.addr %s1892, 12
      %s1894 = smul.addr %s1893, 8
      %s1895 = scalar_lea.vmem %s3, %s1894
      // Predicated region
      $region33: #{gcn_forward.1} parent=31 // pred_check
        %p1896 = pneg %p105
      $region34: #{gcn_forward.1} parent=31 // pred_check_branch
        %1898 = sbr.rel (%p1896) target = $region36
      $region35: #{gcn_forward.1} parent=31 // pred_region
        _
      $region36: #{gcn_forward.1} parent=31 // pred_fallthru
        _
    $region32: #{gcn_forward.1} parent=5 // pred_fallthru
      _
    %p1899 = scmp.le.s32.totalorder 2, %s9
    // Predicated region
    $region37: #{gcn_forward.1} parent=5 // pred_check
      %p1900 = pneg %p1899
    $region38: #{gcn_forward.1} parent=5 // pred_check_branch
      %1902 = sbr.rel (%p1900) target = $region40
    $region39: #{gcn_forward.1} parent=5 // pred_region
      %s1903 = ssub.s32 %s9, 2
      // Predicated region
      $region41: #{gcn_forward.1} parent=39 // pred_check
        %p1904 = pneg %p111
      $region42: #{gcn_forward.1} parent=39 // pred_check_branch
        %1906 = sbr.rel (%p1904) target = $region44
      $region43: #{gcn_forward.1} parent=39 // pred_region
        %p1907 = scmp.lt.s32.totalorder %s15, 3
        %s1908 = scalar_select %p1907, %s15, 3
        %s1909 = smul.addr %s1908, 12
        %s1910 = smul.addr %s1909, 8
        %s1911 = scalar_lea.vmem %s3, %s1910
      $region44: #{gcn_forward.1} parent=39 // pred_fallthru
        _
    $region40: #{gcn_forward.1} parent=5 // pred_fallthru
      _
  $region6: #{gcn_forward.1} parent=0 // loop_footer
    %s13 = sadd.s32 1, %s9
  $region7: #{gcn_forward.1} parent=0 // loop_footer_branch
    %8 = sbr.rel target = $region3
  $region8: #{gcn_forward.1} parent=0 // loop_exit
    _

</llo_original>
